<compile_context>
chip_gen: v5e
topology: v5e:2x2
jax: 0.10.0
libtpu: 0.0.40
codegen_flags: <defaults>
</compile_context>

<pallas_src>
import functools

import jax
import jax.numpy as jnp
from jax.experimental import pallas as pl
from jax.experimental.pallas import tpu as pltpu


# ---------------------------------------------------------------------------
# Helpers
# ---------------------------------------------------------------------------
def _bn_fold(bn, eps=1e-5):
    gamma, beta, mean, var = bn
    scale = gamma / jnp.sqrt(var + eps)
    shift = beta - mean * scale
    return scale, shift


def _fold_conv3(w, bn):
    """PyTorch (Cout, Cin, K) conv weight -> (K, Cin, Cout) with BN scale folded in."""
    scale, shift = _bn_fold(bn)
    wf = jnp.transpose(w, (2, 1, 0)) * scale[None, None, :]
    return wf, shift.reshape(1, -1)


# ---------------------------------------------------------------------------
# Pallas kernels
# ---------------------------------------------------------------------------
def _stem_kernel(ce_ref, co_ref, w_ref, b_ref, o_ref, scr, *, n_even, n_odd):
    """Stem conv (BN scale folded into w) + shift + ReLU for one batch element,
    conv outputs split by output-position parity, fused MaxPool1d(3,2,1) epilogue."""
    ye = jnp.dot(ce_ref[...], w_ref[...], preferred_element_type=jnp.float32)
    ye = jnp.maximum(ye + b_ref[...], 0.0)                     # y[2t]
    yo = jnp.dot(co_ref[...], w_ref[...], preferred_element_type=jnp.float32)
    yo = jnp.maximum(yo + b_ref[...], 0.0)                     # y[2t+1]
    # pool[t] = max(y[2t-1], y[2t], y[2t+1]); zero padding == -inf padding post-ReLU.
    scr[...] = jnp.zeros_like(scr)
    scr[pl.ds(8, n_odd), :] = yo                               # scr[8+j] = y[2j+1]
    m = jnp.maximum(ye, scr[pl.ds(7, n_even), :])              # y[2t-1]
    m = jnp.maximum(m, scr[pl.ds(8, n_even), :])               # y[2t+1]
    o_ref[...] = m.astype(o_ref.dtype)


def _conv3_same(scr, y, w_ref, b_ref, n):
    """k=3 / stride=1 / zero-pad=1 conv over y (n rows) via a zero-padded VMEM
    scratch (BN scale already folded into w, shift added here)."""
    scr[...] = jnp.zeros_like(scr)
    scr[pl.ds(8, n), :] = y
    out = jnp.dot(scr[pl.ds(7, n), :], w_ref[0], preferred_element_type=jnp.float32)
    out = out + jnp.dot(scr[pl.ds(8, n), :], w_ref[1], preferred_element_type=jnp.float32)
    out = out + jnp.dot(scr[pl.ds(9, n), :], w_ref[2], preferred_element_type=jnp.float32)
    return out + b_ref[...]


def _block_s1_kernel(xp_ref, w1_ref, b1_ref, w2_ref, b2_ref, o_ref, scr, *, n):
    """BasicBlock1d, stride 1, identity shortcut; xp_ref is the zero-padded input."""
    y1 = jnp.dot(xp_ref[pl.ds(0, n), :], w1_ref[0], preferred_element_type=jnp.float32)
    y1 = y1 + jnp.dot(xp_ref[pl.ds(1, n), :], w1_ref[1], preferred_element_type=jnp.float32)
    y1 = y1 + jnp.dot(xp_ref[pl.ds(2, n), :], w1_ref[2], preferred_element_type=jnp.float32)
    y1 = jnp.maximum(y1 + b1_ref[...], 0.0)
    y2 = _conv3_same(scr, y1, w2_ref, b2_ref, n)
    res = xp_ref[pl.ds(1, n), :]                               # original (unpadded) x
    o_ref[...] = jnp.maximum(y2 + res, 0.0).astype(o_ref.dtype)


def _block_s2_kernel(xe_ref, xo_ref, w1_ref, b1_ref, w2_ref, b2_ref, wd_ref, bd_ref,
                     o_ref, scr, *, n):
    """BasicBlock1d, stride 2, 1x1-conv + BN downsample shortcut.  xe/xo are the
    even/odd rows of the zero-padded input, so all stride-2 conv taps and the
    downsample input are contiguous slices (no strided loads)."""
    t1 = xo_ref[pl.ds(0, n), :]                                # x_pad[2t+1] == x[2t]
    y1 = jnp.dot(xe_ref[pl.ds(0, n), :], w1_ref[0], preferred_element_type=jnp.float32)
    y1 = y1 + jnp.dot(t1, w1_ref[1], preferred_element_type=jnp.float32)
    y1 = y1 + jnp.dot(xe_ref[pl.ds(1, n), :], w1_ref[2], preferred_element_type=jnp.float32)
    y1 = jnp.maximum(y1 + b1_ref[...], 0.0)
    y2 = _conv3_same(scr, y1, w2_ref, b2_ref, n)
    res = jnp.dot(t1, wd_ref[...], preferred_element_type=jnp.float32) + bd_ref[...]
    o_ref[...] = jnp.maximum(y2 + res, 0.0).astype(o_ref.dtype)


def _head_kernel(x_ref, sm_ref, fm_ref, sa_ref, fa_ref, wm_ref, wa_ref, b_ref, o_ref):
    """AdaptiveConcatPool1d ([max, avg]) -> BN1d -> (Dropout=id) -> Linear,
    one batch element.  1/L is folded into sa so avg-pool is a plain sum."""
    x = x_ref[...]                                             # (L, C)
    x_max = jnp.max(x, axis=0, keepdims=True)                  # (1, C)
    x_sum = jnp.sum(x, axis=0, keepdims=True)                  # (1, C)
    hm = x_max * sm_ref[...] + fm_ref[...]
    ha = x_sum * sa_ref[...] + fa_ref[...]
    o = jnp.dot(hm, wm_ref[...], preferred_element_type=jnp.float32)
    o = o + jnp.dot(ha, wa_ref[...], preferred_element_type=jnp.float32)
    o_ref[...] = (o + b_ref[...]).astype(o_ref.dtype)


# ---------------------------------------------------------------------------
# Layer wrappers (pallas_call plumbing)
# ---------------------------------------------------------------------------
_CPARAMS = pltpu.CompilerParams(dimension_semantics=("parallel",))


def stem_maxpool(x, w, bn):
    """Conv1d(k=3, s=2, p=1, bias=False) + BN + ReLU + MaxPool1d(3, 2, 1)."""
    B, L, Cin = x.shape
    Cout, _, K = w.shape
    Ls = (L + 2 - K) // 2 + 1                                  # conv output length
    Lp = (Ls - 1) // 2 + 1                                     # pool output length
    n_even, n_odd = Lp, Ls - Lp
    scale, shift = _bn_fold(bn)
    w2 = jnp.transpose(w, (2, 1, 0)).reshape(K * Cin, Cout) * scale[None, :]
    shift = shift.reshape(1, Cout)
    # im2col only for the tiny stem (Cin=3 -> 9 columns), split by output parity
    # so the fused maxpool needs only contiguous slices in-kernel.
    xp = jnp.pad(x, ((0, 0), (1, 1), (0, 0)))
    cols = jnp.concatenate([xp[:, k:k + 2 * Ls:2, :] for k in range(K)], axis=-1)
    cols_e, cols_o = cols[:, 0::2, :], cols[:, 1::2, :]
    kern = functools.partial(_stem_kernel, n_even=n_even, n_odd=n_odd)
    return pl.pallas_call(
        kern,
        out_shape=jax.ShapeDtypeStruct((B, Lp, Cout), jnp.float32),
        grid=(B,),
        in_specs=[
            pl.BlockSpec((None, n_even, K * Cin), lambda b: (b, 0, 0)),
            pl.BlockSpec((None, n_odd, K * Cin), lambda b: (b, 0, 0)),
            pl.BlockSpec((K * Cin, Cout), lambda b: (0, 0)),
            pl.BlockSpec((1, Cout), lambda b: (0, 0)),
        ],
        out_specs=pl.BlockSpec((None, Lp, Cout), lambda b: (b, 0, 0)),
        scratch_shapes=[pltpu.VMEM((n_even + 8, Cout), jnp.float32)],
        compiler_params=_CPARAMS,
    )(cols_e, cols_o, w2, shift)


def basic_block(x, w1, bn1, w2, bn2, wd=None, bnd=None, *, stride=1):
    """Fused BasicBlock1d: conv1+BN+ReLU -> conv2+BN -> (+identity / downsample) -> ReLU."""
    B, L, C = x.shape
    n = (L - 1) // stride + 1                                  # output length
    w1f, b1 = _fold_conv3(w1, bn1)
    w2f, b2 = _fold_conv3(w2, bn2)
    xp = jnp.pad(x, ((0, 0), (1, 1), (0, 0)))

    w_spec = pl.BlockSpec((3, C, C), lambda b: (0, 0, 0))
    v_spec = pl.BlockSpec((1, C), lambda b: (0, 0))
    out_spec = pl.BlockSpec((None, n, C), lambda b: (b, 0, 0))
    scratch = [pltpu.VMEM((n + 16, C), jnp.float32)]
    out_shape = jax.ShapeDtypeStruct((B, n, C), jnp.float32)

    if stride == 1:
        kern = functools.partial(_block_s1_kernel, n=n)
        return pl.pallas_call(
            kern, out_shape=out_shape, grid=(B,),
            in_specs=[pl.BlockSpec((None, L + 2, C), lambda b: (b, 0, 0)),
                      w_spec, v_spec, w_spec, v_spec],
            out_specs=out_spec, scratch_shapes=scratch, compiler_params=_CPARAMS,
        )(xp, w1f, b1, w2f, b2)

    # stride == 2 path with 1x1-conv + BN downsample shortcut.
    sd, shd = _bn_fold(bnd)
    wdf = wd[:, :, 0].T * sd[None, :]                          # (Cin, Cout)
    bd = shd.reshape(1, C)
    xe, xo = xp[:, 0::2, :], xp[:, 1::2, :]                    # parity split (no expansion)
    ne, no = xe.shape[1], xo.shape[1]
    kern = functools.partial(_block_s2_kernel, n=n)
    return pl.pallas_call(
        kern, out_shape=out_shape, grid=(B,),
        in_specs=[pl.BlockSpec((None, ne, C), lambda b: (b, 0, 0)),
                  pl.BlockSpec((None, no, C), lambda b: (b, 0, 0)),
                  w_spec, v_spec, w_spec, v_spec,
                  pl.BlockSpec((C, C), lambda b: (0, 0)), v_spec],
        out_specs=out_spec, scratch_shapes=scratch, compiler_params=_CPARAMS,
    )(xe, xo, w1f, b1, w2f, b2, wdf, bd)


def concat_pool_head(x, bn, w, b):
    """AdaptiveConcatPool1d + Flatten + [BN1d(2C), Dropout(eval), Linear(2C, nc)]."""
    B, L, C = x.shape
    nc = w.shape[0]
    scale, shift = _bn_fold(bn)                                # (2C,), order [max, avg]
    sm, fm = scale[:C].reshape(1, C), shift[:C].reshape(1, C)
    sa, fa = (scale[C:] / L).reshape(1, C), shift[C:].reshape(1, C)   # fold 1/L
    wt = w.T                                                   # (2C, nc)
    wm, wa = wt[:C], wt[C:]
    bb = b.reshape(1, nc)
    v_spec = pl.BlockSpec((1, C), lambda i: (0, 0))
    out = pl.pallas_call(
        _head_kernel,
        out_shape=jax.ShapeDtypeStruct((B, 1, nc), jnp.float32),
        grid=(B,),
        in_specs=[pl.BlockSpec((None, L, C), lambda i: (i, 0, 0)),
                  v_spec, v_spec, v_spec, v_spec,
                  pl.BlockSpec((C, nc), lambda i: (0, 0)),
                  pl.BlockSpec((C, nc), lambda i: (0, 0)),
                  pl.BlockSpec((1, nc), lambda i: (0, 0))],
        out_specs=pl.BlockSpec((None, 1, nc), lambda i: (i, 0, 0)),
        compiler_params=_CPARAMS,
    )(x, sm, fm, sa, fa, wm, wa, bb)
    return out.reshape(B, nc)


# ---------------------------------------------------------------------------
# Pure-JAX reference path (verification only)
# ---------------------------------------------------------------------------
def _ref_conv_bn(x, w, bn, *, stride, padding, relu, residual=None):
    B, L, Cin = x.shape
    Cout, _, K = w.shape
    Lout = (L + 2 * padding - K) // stride + 1
    xp = jnp.pad(x, ((0, 0), (padding, padding), (0, 0)))
    cols = jnp.concatenate([xp[:, k:k + stride * Lout:stride, :] for k in range(K)], axis=-1)
    w2 = jnp.transpose(w, (2, 1, 0)).reshape(K * Cin, Cout)
    scale, shift = _bn_fold(bn)
    y = jnp.dot(cols.reshape(B * Lout, K * Cin), w2) * scale + shift
    y = y.reshape(B, Lout, Cout)
    if residual is not None:
        y = y + residual
    if relu:
        y = jnp.maximum(y, 0.0)
    return y


def _ref_maxpool(x):
    B, L, C = x.shape
    Lout = (L + 2 - 3) // 2 + 1
    xp = jnp.pad(x, ((0, 0), (1, 1), (0, 0)), constant_values=-jnp.inf)
    taps = [xp[:, k:k + 2 * Lout:2, :] for k in range(3)]
    return jnp.maximum(jnp.maximum(taps[0], taps[1]), taps[2])


def _ref_head(x, bn, w, b):
    mx = jnp.max(x, axis=1)
    av = jnp.mean(x, axis=1)
    feat = jnp.concatenate([mx, av], axis=-1)
    scale, shift = _bn_fold(bn)
    return (feat * scale + shift) @ w.T + b


# ---------------------------------------------------------------------------
# ResNet1d: BasicBlock, layers=[1, 1], kernel_size=3, inplanes=64,
# input_channels=3, num_classes=2, fix_feature_dim=True, concat_pooling=True
# ---------------------------------------------------------------------------
def init_params(key, *, input_channels=3, inplanes=64, num_classes=2, k=3):
    def conv_w(key, cout, cin, ksz):
        fan_in = cin * ksz
        return jax.random.normal(key, (cout, cin, ksz), jnp.float32) / jnp.sqrt(fan_in)

    def bn_p(key, c):
        k1, k2, k3, k4 = jax.random.split(key, 4)
        gamma = 1.0 + 0.1 * jax.random.normal(k1, (c,), jnp.float32)
        beta = 0.1 * jax.random.normal(k2, (c,), jnp.float32)
        mean = 0.1 * jax.random.normal(k3, (c,), jnp.float32)
        var = 1.0 + 0.1 * jax.random.uniform(k4, (c,), jnp.float32)
        return (gamma, beta, mean, var)

    ks = jax.random.split(key, 16)
    p = {}
    p["stem_w"] = conv_w(ks[0], inplanes, input_channels, k)
    p["stem_bn"] = bn_p(ks[1], inplanes)
    p["b0_w1"] = conv_w(ks[2], inplanes, inplanes, k)
    p["b0_bn1"] = bn_p(ks[3], inplanes)
    p["b0_w2"] = conv_w(ks[4], inplanes, inplanes, k)
    p["b0_bn2"] = bn_p(ks[5], inplanes)
    p["b1_w1"] = conv_w(ks[6], inplanes, inplanes, k)
    p["b1_bn1"] = bn_p(ks[7], inplanes)
    p["b1_w2"] = conv_w(ks[8], inplanes, inplanes, k)
    p["b1_bn2"] = bn_p(ks[9], inplanes)
    p["b1_dw"] = conv_w(ks[10], inplanes, inplanes, 1)
    p["b1_dbn"] = bn_p(ks[11], inplanes)
    nf2 = 2 * inplanes
    p["head_bn"] = bn_p(ks[12], nf2)
    p["head_w"] = jax.random.normal(ks[13], (num_classes, nf2), jnp.float32) / jnp.sqrt(nf2)
    p["head_b"] = 0.1 * jax.random.normal(ks[14], (num_classes,), jnp.float32)
    return p


def resnet1d_forward(params, x, *, use_pallas=True):
    """x: (B, L, C_in) -> logits (B, num_classes)."""
    if not use_pallas:  # pure-JAX reference
        x = _ref_conv_bn(x, params["stem_w"], params["stem_bn"],
                         stride=2, padding=1, relu=True)
        x = _ref_maxpool(x)
        y = _ref_conv_bn(x, params["b0_w1"], params["b0_bn1"],
                         stride=1, padding=1, relu=True)
        x = _ref_conv_bn(y, params["b0_w2"], params["b0_bn2"],
                         stride=1, padding=1, relu=True, residual=x)
        sc = _ref_conv_bn(x, params["b1_dw"], params["b1_dbn"],
                          stride=2, padding=0, relu=False)
        y = _ref_conv_bn(x, params["b1_w1"], params["b1_bn1"],
                         stride=2, padding=1, relu=True)
        x = _ref_conv_bn(y, params["b1_w2"], params["b1_bn2"],
                         stride=1, padding=1, relu=True, residual=sc)
        return _ref_head(x, params["head_bn"], params["head_w"], params["head_b"])

    x = stem_maxpool(x, params["stem_w"], params["stem_bn"])
    x = basic_block(x, params["b0_w1"], params["b0_bn1"],
                    params["b0_w2"], params["b0_bn2"], stride=1)
    x = basic_block(x, params["b1_w1"], params["b1_bn1"],
                    params["b1_w2"], params["b1_bn2"],
                    wd=params["b1_dw"], bnd=params["b1_dbn"], stride=2)
    return concat_pool_head(x, params["head_bn"], params["head_w"], params["head_b"])


if __name__ == "__main__":
    key = jax.random.PRNGKey(0)
    pkey, xkey = jax.random.split(key)
    params = init_params(pkey)

    B, L, C_in = 2, 64, 3
    x = jax.random.normal(xkey, (B, L, C_in), jnp.float32)

    pallas_fn = jax.jit(lambda p, v: resnet1d_forward(p, v, use_pallas=True))
    out = jax.block_until_ready(pallas_fn(params, x))
    ref = jax.block_until_ready(resnet1d_forward(params, x, use_pallas=False))

    assert out.shape == (B, 2), out.shape
    assert jnp.allclose(out, ref, atol=1e-3, rtol=1e-3), (out, ref)
    print("KERNEL_OK")
</pallas_src>

<mosaic_0001>
module attributes {stable_mosaic.version = 11 : i64} {
  func.func @_stem_kernel(%arg0: i32, %arg1: memref<1x16x9xf32, #tpu.memory_space<vmem>>, %arg2: memref<1x16x9xf32, #tpu.memory_space<vmem>>, %arg3: memref<9x64xf32, #tpu.memory_space<vmem>>, %arg4: memref<1x64xf32, #tpu.memory_space<vmem>>, %arg5: memref<1x16x64xf32, #tpu.memory_space<vmem>>, %arg6: memref<24x64xf32, #tpu.memory_space<vmem>>) attributes {dimension_semantics = [#tpu.dimension_semantics<parallel>], iteration_bounds = array<i64: 2>, scalar_prefetch = 0 : i64, scratch_operands = 1 : i64, tpu.core_type = #tpu.core_type<tc>, window_params = [{transform_indices = @transform_0, window_bounds = array<i64: 1, 16, 9>}, {transform_indices = @transform_1, window_bounds = array<i64: 1, 16, 9>}, {pipeline_mode = #tpu.pipeline_mode<synchronous>, transform_indices = @transform_2, window_bounds = array<i64: 9, 64>}, {pipeline_mode = #tpu.pipeline_mode<synchronous>, transform_indices = @transform_3, window_bounds = array<i64: 1, 64>}, {transform_indices = @transform_4, window_bounds = array<i64: 1, 16, 64>}]} {
    %c0 = arith.constant 0 : index
    %c0_0 = arith.constant 0 : index
    %c0_1 = arith.constant 0 : index
    %0 = vector.load %arg1[%c0, %c0_0, %c0_1] : memref<1x16x9xf32, #tpu.memory_space<vmem>>, vector<1x16x9xf32>
    %1 = vector.shape_cast %0 : vector<1x16x9xf32> to vector<16x9xf32>
    %c0_2 = arith.constant 0 : index
    %c0_3 = arith.constant 0 : index
    %2 = vector.load %arg3[%c0_2, %c0_3] : memref<9x64xf32, #tpu.memory_space<vmem>>, vector<9x64xf32>
    %cst = arith.constant dense<0.000000e+00> : vector<16x64xf32>
    %3 = tpu.matmul %1, %2, %cst {dimension_numbers = #tpu.dot_dimension_numbers<[1], [0], [0], [1], [0, 0, 1, 1], [], []>} : vector<16x9xf32>, vector<9x64xf32>, vector<16x64xf32> -> vector<16x64xf32>
    %c0_4 = arith.constant 0 : index
    %c0_5 = arith.constant 0 : index
    %4 = vector.load %arg4[%c0_4, %c0_5] : memref<1x64xf32, #tpu.memory_space<vmem>>, vector<1x64xf32>
    %5 = vector.broadcast %4 : vector<1x64xf32> to vector<16x64xf32>
    %6 = arith.addf %3, %5 : vector<16x64xf32>
    %cst_6 = arith.constant 0.000000e+00 : f32
    %7 = vector.broadcast %cst_6 : f32 to vector<16x64xf32>
    %8 = arith.maximumf %6, %7 : vector<16x64xf32>
    %c0_7 = arith.constant 0 : index
    %c0_8 = arith.constant 0 : index
    %c0_9 = arith.constant 0 : index
    %9 = vector.load %arg2[%c0_7, %c0_8, %c0_9] : memref<1x16x9xf32, #tpu.memory_space<vmem>>, vector<1x16x9xf32>
    %10 = vector.shape_cast %9 : vector<1x16x9xf32> to vector<16x9xf32>
    %c0_10 = arith.constant 0 : index
    %c0_11 = arith.constant 0 : index
    %11 = vector.load %arg3[%c0_10, %c0_11] : memref<9x64xf32, #tpu.memory_space<vmem>>, vector<9x64xf32>
    %cst_12 = arith.constant dense<0.000000e+00> : vector<16x64xf32>
    %12 = tpu.matmul %10, %11, %cst_12 {dimension_numbers = #tpu.dot_dimension_numbers<[1], [0], [0], [1], [0, 0, 1, 1], [], []>} : vector<16x9xf32>, vector<9x64xf32>, vector<16x64xf32> -> vector<16x64xf32>
    %c0_13 = arith.constant 0 : index
    %c0_14 = arith.constant 0 : index
    %13 = vector.load %arg4[%c0_13, %c0_14] : memref<1x64xf32, #tpu.memory_space<vmem>>, vector<1x64xf32>
    %14 = vector.broadcast %13 : vector<1x64xf32> to vector<16x64xf32>
    %15 = arith.addf %12, %14 : vector<16x64xf32>
    %cst_15 = arith.constant 0.000000e+00 : f32
    %16 = vector.broadcast %cst_15 : f32 to vector<16x64xf32>
    %17 = arith.maximumf %15, %16 : vector<16x64xf32>
    %cst_16 = arith.constant 0.000000e+00 : f32
    %18 = vector.broadcast %cst_16 : f32 to vector<24x64xf32>
    %c0_17 = arith.constant 0 : index
    %c0_18 = arith.constant 0 : index
    %19 = vector.load %arg6[%c0_17, %c0_18] : memref<24x64xf32, #tpu.memory_space<vmem>>, vector<24x64xf32>
    tpu.vector_store %arg6[%c0_17, %c0_18], %18 {strides = array<i32>} : memref<24x64xf32, #tpu.memory_space<vmem>>, vector<24x64xf32>,
    %c8 = arith.constant 8 : index
    %c0_19 = arith.constant 0 : index
    %20 = vector.load %arg6[%c8, %c0_19] : memref<24x64xf32, #tpu.memory_space<vmem>>, vector<16x64xf32>
    tpu.vector_store %arg6[%c8, %c0_19], %17 {strides = array<i32>} : memref<24x64xf32, #tpu.memory_space<vmem>>, vector<16x64xf32>,
    %c7 = arith.constant 7 : index
    %c0_20 = arith.constant 0 : index
    %21 = vector.load %arg6[%c7, %c0_20] : memref<24x64xf32, #tpu.memory_space<vmem>>, vector<16x64xf32>
    %22 = arith.maximumf %8, %21 : vector<16x64xf32>
    %c8_21 = arith.constant 8 : index
    %c0_22 = arith.constant 0 : index
    %23 = vector.load %arg6[%c8_21, %c0_22] : memref<24x64xf32, #tpu.memory_space<vmem>>, vector<16x64xf32>
    %24 = arith.maximumf %22, %23 : vector<16x64xf32>
    %c0_23 = arith.constant 0 : index
    %c0_24 = arith.constant 0 : index
    %c0_25 = arith.constant 0 : index
    %25 = vector.load %arg5[%c0_23, %c0_24, %c0_25] : memref<1x16x64xf32, #tpu.memory_space<vmem>>, vector<1x16x64xf32>
    %26 = vector.shape_cast %25 : vector<1x16x64xf32> to vector<16x64xf32>
    %27 = vector.shape_cast %24 : vector<16x64xf32> to vector<1x16x64xf32>
    tpu.vector_store %arg5[%c0_23, %c0_24, %c0_25], %27 {strides = array<i32>} : memref<1x16x64xf32, #tpu.memory_space<vmem>>, vector<1x16x64xf32>,
    return
  }
  func.func @transform_0(%arg0: i32) -> (i32, i32, i32) {
    %c0_i32 = arith.constant 0 : i32
    %c0_i32_0 = arith.constant 0 : i32
    %c0_i32_1 = arith.constant 0 : i32
    return %arg0, %c0_i32, %c0_i32_0 : i32, i32, i32
  }
  func.func @transform_1(%arg0: i32) -> (i32, i32, i32) {
    %c0_i32 = arith.constant 0 : i32
    %c0_i32_0 = arith.constant 0 : i32
    %c0_i32_1 = arith.constant 0 : i32
    return %arg0, %c0_i32, %c0_i32_0 : i32, i32, i32
  }
  func.func @transform_2(%arg0: i32) -> (i32, i32) {
    %c0_i32 = arith.constant 0 : i32
    %c0_i32_0 = arith.constant 0 : i32
    %c0_i32_1 = arith.constant 0 : i32
    return %c0_i32, %c0_i32_0 : i32, i32
  }
  func.func @transform_3(%arg0: i32) -> (i32, i32) {
    %c0_i32 = arith.constant 0 : i32
    %c0_i32_0 = arith.constant 0 : i32
    %c0_i32_1 = arith.constant 0 : i32
    return %c0_i32, %c0_i32_0 : i32, i32
  }
  func.func @transform_4(%arg0: i32) -> (i32, i32, i32) {
    %c0_i32 = arith.constant 0 : i32
    %c0_i32_0 = arith.constant 0 : i32
    %c0_i32_1 = arith.constant 0 : i32
    return %arg0, %c0_i32, %c0_i32_0 : i32, i32, i32
  }
}

module attributes {stable_mosaic.version = 11 : i64} {
  func.func @_block_s1_kernel(%arg0: i32, %arg1: memref<1x18x64xf32, #tpu.memory_space<vmem>>, %arg2: memref<3x64x64xf32, #tpu.memory_space<vmem>>, %arg3: memref<1x64xf32, #tpu.memory_space<vmem>>, %arg4: memref<3x64x64xf32, #tpu.memory_space<vmem>>, %arg5: memref<1x64xf32, #tpu.memory_space<vmem>>, %arg6: memref<1x16x64xf32, #tpu.memory_space<vmem>>, %arg7: memref<32x64xf32, #tpu.memory_space<vmem>>) attributes {dimension_semantics = [#tpu.dimension_semantics<parallel>], iteration_bounds = array<i64: 2>, scalar_prefetch = 0 : i64, scratch_operands = 1 : i64, tpu.core_type = #tpu.core_type<tc>, window_params = [{transform_indices = @transform_0, window_bounds = array<i64: 1, 18, 64>}, {pipeline_mode = #tpu.pipeline_mode<synchronous>, transform_indices = @transform_1, window_bounds = array<i64: 3, 64, 64>}, {pipeline_mode = #tpu.pipeline_mode<synchronous>, transform_indices = @transform_2, window_bounds = array<i64: 1, 64>}, {pipeline_mode = #tpu.pipeline_mode<synchronous>, transform_indices = @transform_3, window_bounds = array<i64: 3, 64, 64>}, {pipeline_mode = #tpu.pipeline_mode<synchronous>, transform_indices = @transform_4, window_bounds = array<i64: 1, 64>}, {transform_indices = @transform_5, window_bounds = array<i64: 1, 16, 64>}]} {
    %c0 = arith.constant 0 : index
    %c0_0 = arith.constant 0 : index
    %c0_1 = arith.constant 0 : index
    %0 = vector.load %arg1[%c0, %c0_0, %c0_1] : memref<1x18x64xf32, #tpu.memory_space<vmem>>, vector<1x16x64xf32>
    %1 = vector.shape_cast %0 : vector<1x16x64xf32> to vector<16x64xf32>
    %c0_2 = arith.constant 0 : index
    %c0_3 = arith.constant 0 : index
    %c0_4 = arith.constant 0 : index
    %2 = vector.load %arg2[%c0_2, %c0_3, %c0_4] : memref<3x64x64xf32, #tpu.memory_space<vmem>>, vector<1x64x64xf32>
    %3 = vector.shape_cast %2 : vector<1x64x64xf32> to vector<64x64xf32>
    %cst = arith.constant dense<0.000000e+00> : vector<16x64xf32>
    %4 = tpu.matmul %1, %3, %cst {dimension_numbers = #tpu.dot_dimension_numbers<[1], [0], [0], [1], [0, 0, 1, 1], [], []>} : vector<16x64xf32>, vector<64x64xf32>, vector<16x64xf32> -> vector<16x64xf32>
    %c0_5 = arith.constant 0 : index
    %c1 = arith.constant 1 : index
    %c0_6 = arith.constant 0 : index
    %5 = vector.load %arg1[%c0_5, %c1, %c0_6] : memref<1x18x64xf32, #tpu.memory_space<vmem>>, vector<1x16x64xf32>
    %6 = vector.shape_cast %5 : vector<1x16x64xf32> to vector<16x64xf32>
    %c1_7 = arith.constant 1 : index
    %c0_8 = arith.constant 0 : index
    %c0_9 = arith.constant 0 : index
    %7 = vector.load %arg2[%c1_7, %c0_8, %c0_9] : memref<3x64x64xf32, #tpu.memory_space<vmem>>, vector<1x64x64xf32>
    %8 = vector.shape_cast %7 : vector<1x64x64xf32> to vector<64x64xf32>
    %cst_10 = arith.constant dense<0.000000e+00> : vector<16x64xf32>
    %9 = tpu.matmul %6, %8, %cst_10 {dimension_numbers = #tpu.dot_dimension_numbers<[1], [0], [0], [1], [0, 0, 1, 1], [], []>} : vector<16x64xf32>, vector<64x64xf32>, vector<16x64xf32> -> vector<16x64xf32>
    %10 = arith.addf %4, %9 : vector<16x64xf32>
    %c0_11 = arith.constant 0 : index
    %c2 = arith.constant 2 : index
    %c0_12 = arith.constant 0 : index
    %11 = vector.load %arg1[%c0_11, %c2, %c0_12] : memref<1x18x64xf32, #tpu.memory_space<vmem>>, vector<1x16x64xf32>
    %12 = vector.shape_cast %11 : vector<1x16x64xf32> to vector<16x64xf32>
    %c2_13 = arith.constant 2 : index
    %c0_14 = arith.constant 0 : index
    %c0_15 = arith.constant 0 : index
    %13 = vector.load %arg2[%c2_13, %c0_14, %c0_15] : memref<3x64x64xf32, #tpu.memory_space<vmem>>, vector<1x64x64xf32>
    %14 = vector.shape_cast %13 : vector<1x64x64xf32> to vector<64x64xf32>
    %cst_16 = arith.constant dense<0.000000e+00> : vector<16x64xf32>
    %15 = tpu.matmul %12, %14, %cst_16 {dimension_numbers = #tpu.dot_dimension_numbers<[1], [0], [0], [1], [0, 0, 1, 1], [], []>} : vector<16x64xf32>, vector<64x64xf32>, vector<16x64xf32> -> vector<16x64xf32>
    %16 = arith.addf %10, %15 : vector<16x64xf32>
    %c0_17 = arith.constant 0 : index
    %c0_18 = arith.constant 0 : index
    %17 = vector.load %arg3[%c0_17, %c0_18] : memref<1x64xf32, #tpu.memory_space<vmem>>, vector<1x64xf32>
    %18 = vector.broadcast %17 : vector<1x64xf32> to vector<16x64xf32>
    %19 = arith.addf %16, %18 : vector<16x64xf32>
    %cst_19 = arith.constant 0.000000e+00 : f32
    %20 = vector.broadcast %cst_19 : f32 to vector<16x64xf32>
    %21 = arith.maximumf %19, %20 : vector<16x64xf32>
    %cst_20 = arith.constant 0.000000e+00 : f32
    %22 = vector.broadcast %cst_20 : f32 to vector<32x64xf32>
    %c0_21 = arith.constant 0 : index
    %c0_22 = arith.constant 0 : index
    %23 = vector.load %arg7[%c0_21, %c0_22] : memref<32x64xf32, #tpu.memory_space<vmem>>, vector<32x64xf32>
    tpu.vector_store %arg7[%c0_21, %c0_22], %22 {strides = array<i32>} : memref<32x64xf32, #tpu.memory_space<vmem>>, vector<32x64xf32>,
    %c8 = arith.constant 8 : index
    %c0_23 = arith.constant 0 : index
    %24 = vector.load %arg7[%c8, %c0_23] : memref<32x64xf32, #tpu.memory_space<vmem>>, vector<16x64xf32>
    tpu.vector_store %arg7[%c8, %c0_23], %21 {strides = array<i32>} : memref<32x64xf32, #tpu.memory_space<vmem>>, vector<16x64xf32>,
    %c7 = arith.constant 7 : index
    %c0_24 = arith.constant 0 : index
    %25 = vector.load %arg7[%c7, %c0_24] : memref<32x64xf32, #tpu.memory_space<vmem>>, vector<16x64xf32>
    %c0_25 = arith.constant 0 : index
    %c0_26 = arith.constant 0 : index
    %c0_27 = arith.constant 0 : index
    %26 = vector.load %arg4[%c0_25, %c0_26, %c0_27] : memref<3x64x64xf32, #tpu.memory_space<vmem>>, vector<1x64x64xf32>
    %27 = vector.shape_cast %26 : vector<1x64x64xf32> to vector<64x64xf32>
    %cst_28 = arith.constant dense<0.000000e+00> : vector<16x64xf32>
    %28 = tpu.matmul %25, %27, %cst_28 {dimension_numbers = #tpu.dot_dimension_numbers<[1], [0], [0], [1], [0, 0, 1, 1], [], []>} : vector<16x64xf32>, vector<64x64xf32>, vector<16x64xf32> -> vector<16x64xf32>
    %c8_29 = arith.constant 8 : index
    %c0_30 = arith.constant 0 : index
    %29 = vector.load %arg7[%c8_29, %c0_30] : memref<32x64xf32, #tpu.memory_space<vmem>>, vector<16x64xf32>
    %c1_31 = arith.constant 1 : index
    %c0_32 = arith.constant 0 : index
    %c0_33 = arith.constant 0 : index
    %30 = vector.load %arg4[%c1_31, %c0_32, %c0_33] : memref<3x64x64xf32, #tpu.memory_space<vmem>>, vector<1x64x64xf32>
    %31 = vector.shape_cast %30 : vector<1x64x64xf32> to vector<64x64xf32>
    %cst_34 = arith.constant dense<0.000000e+00> : vector<16x64xf32>
    %32 = tpu.matmul %29, %31, %cst_34 {dimension_numbers = #tpu.dot_dimension_numbers<[1], [0], [0], [1], [0, 0, 1, 1], [], []>} : vector<16x64xf32>, vector<64x64xf32>, vector<16x64xf32> -> vector<16x64xf32>
    %33 = arith.addf %28, %32 : vector<16x64xf32>
    %c9 = arith.constant 9 : index
    %c0_35 = arith.constant 0 : index
    %34 = vector.load %arg7[%c9, %c0_35] : memref<32x64xf32, #tpu.memory_space<vmem>>, vector<16x64xf32>
    %c2_36 = arith.constant 2 : index
    %c0_37 = arith.constant 0 : index
    %c0_38 = arith.constant 0 : index
    %35 = vector.load %arg4[%c2_36, %c0_37, %c0_38] : memref<3x64x64xf32, #tpu.memory_space<vmem>>, vector<1x64x64xf32>
    %36 = vector.shape_cast %35 : vector<1x64x64xf32> to vector<64x64xf32>
    %cst_39 = arith.constant dense<0.000000e+00> : vector<16x64xf32>
    %37 = tpu.matmul %34, %36, %cst_39 {dimension_numbers = #tpu.dot_dimension_numbers<[1], [0], [0], [1], [0, 0, 1, 1], [], []>} : vector<16x64xf32>, vector<64x64xf32>, vector<16x64xf32> -> vector<16x64xf32>
    %38 = arith.addf %33, %37 : vector<16x64xf32>
    %c0_40 = arith.constant 0 : index
    %c0_41 = arith.constant 0 : index
    %39 = vector.load %arg5[%c0_40, %c0_41] : memref<1x64xf32, #tpu.memory_space<vmem>>, vector<1x64xf32>
    %40 = vector.broadcast %39 : vector<1x64xf32> to vector<16x64xf32>
    %41 = arith.addf %38, %40 : vector<16x64xf32>
    %c0_42 = arith.constant 0 : index
    %c1_43 = arith.constant 1 : index
    %c0_44 = arith.constant 0 : index
    %42 = vector.load %arg1[%c0_42, %c1_43, %c0_44] : memref<1x18x64xf32, #tpu.memory_space<vmem>>, vector<1x16x64xf32>
    %43 = vector.shape_cast %42 : vector<1x16x64xf32> to vector<16x64xf32>
    %44 = arith.addf %41, %43 : vector<16x64xf32>
    %cst_45 = arith.constant 0.000000e+00 : f32
    %45 = vector.broadcast %cst_45 : f32 to vector<16x64xf32>
    %46 = arith.maximumf %44, %45 : vector<16x64xf32>
    %c0_46 = arith.constant 0 : index
    %c0_47 = arith.constant 0 : index
    %c0_48 = arith.constant 0 : index
    %47 = vector.load %arg6[%c0_46, %c0_47, %c0_48] : memref<1x16x64xf32, #tpu.memory_space<vmem>>, vector<1x16x64xf32>
    %48 = vector.shape_cast %47 : vector<1x16x64xf32> to vector<16x64xf32>
    %49 = vector.shape_cast %46 : vector<16x64xf32> to vector<1x16x64xf32>
    tpu.vector_store %arg6[%c0_46, %c0_47, %c0_48], %49 {strides = array<i32>} : memref<1x16x64xf32, #tpu.memory_space<vmem>>, vector<1x16x64xf32>,
    return
  }
  func.func @transform_0(%arg0: i32) -> (i32, i32, i32) {
    %c0_i32 = arith.constant 0 : i32
    %c0_i32_0 = arith.constant 0 : i32
    %c0_i32_1 = arith.constant 0 : i32
    return %arg0, %c0_i32, %c0_i32_0 : i32, i32, i32
  }
  func.func @transform_1(%arg0: i32) -> (i32, i32, i32) {
    %c0_i32 = arith.constant 0 : i32
    %c0_i32_0 = arith.constant 0 : i32
    %c0_i32_1 = arith.constant 0 : i32
    %c0_i32_2 = arith.constant 0 : i32
    return %c0_i32, %c0_i32_0, %c0_i32_1 : i32, i32, i32
  }
  func.func @transform_2(%arg0: i32) -> (i32, i32) {
    %c0_i32 = arith.constant 0 : i32
    %c0_i32_0 = arith.constant 0 : i32
    %c0_i32_1 = arith.constant 0 : i32
    return %c0_i32, %c0_i32_0 : i32, i32
  }
  func.func @transform_3(%arg0: i32) -> (i32, i32, i32) {
    %c0_i32 = arith.constant 0 : i32
    %c0_i32_0 = arith.constant 0 : i32
    %c0_i32_1 = arith.constant 0 : i32
    %c0_i32_2 = arith.constant 0 : i32
    return %c0_i32, %c0_i32_0, %c0_i32_1 : i32, i32, i32
  }
  func.func @transform_4(%arg0: i32) -> (i32, i32) {
    %c0_i32 = arith.constant 0 : i32
    %c0_i32_0 = arith.constant 0 : i32
    %c0_i32_1 = arith.constant 0 : i32
    return %c0_i32, %c0_i32_0 : i32, i32
  }
  func.func @transform_5(%arg0: i32) -> (i32, i32, i32) {
    %c0_i32 = arith.constant 0 : i32
    %c0_i32_0 = arith.constant 0 : i32
    %c0_i32_1 = arith.constant 0 : i32
    return %arg0, %c0_i32, %c0_i32_0 : i32, i32, i32
  }
}

module attributes {stable_mosaic.version = 11 : i64} {
  func.func @_block_s2_kernel(%arg0: i32, %arg1: memref<1x9x64xf32, #tpu.memory_space<vmem>>, %arg2: memref<1x9x64xf32, #tpu.memory_space<vmem>>, %arg3: memref<3x64x64xf32, #tpu.memory_space<vmem>>, %arg4: memref<1x64xf32, #tpu.memory_space<vmem>>, %arg5: memref<3x64x64xf32, #tpu.memory_space<vmem>>, %arg6: memref<1x64xf32, #tpu.memory_space<vmem>>, %arg7: memref<64x64xf32, #tpu.memory_space<vmem>>, %arg8: memref<1x64xf32, #tpu.memory_space<vmem>>, %arg9: memref<1x8x64xf32, #tpu.memory_space<vmem>>, %arg10: memref<24x64xf32, #tpu.memory_space<vmem>>) attributes {dimension_semantics = [#tpu.dimension_semantics<parallel>], iteration_bounds = array<i64: 2>, scalar_prefetch = 0 : i64, scratch_operands = 1 : i64, tpu.core_type = #tpu.core_type<tc>, window_params = [{transform_indices = @transform_0, window_bounds = array<i64: 1, 9, 64>}, {transform_indices = @transform_1, window_bounds = array<i64: 1, 9, 64>}, {pipeline_mode = #tpu.pipeline_mode<synchronous>, transform_indices = @transform_2, window_bounds = array<i64: 3, 64, 64>}, {pipeline_mode = #tpu.pipeline_mode<synchronous>, transform_indices = @transform_3, window_bounds = array<i64: 1, 64>}, {pipeline_mode = #tpu.pipeline_mode<synchronous>, transform_indices = @transform_4, window_bounds = array<i64: 3, 64, 64>}, {pipeline_mode = #tpu.pipeline_mode<synchronous>, transform_indices = @transform_5, window_bounds = array<i64: 1, 64>}, {pipeline_mode = #tpu.pipeline_mode<synchronous>, transform_indices = @transform_6, window_bounds = array<i64: 64, 64>}, {pipeline_mode = #tpu.pipeline_mode<synchronous>, transform_indices = @transform_7, window_bounds = array<i64: 1, 64>}, {transform_indices = @transform_8, window_bounds = array<i64: 1, 8, 64>}]} {
    %c0 = arith.constant 0 : index
    %c0_0 = arith.constant 0 : index
    %c0_1 = arith.constant 0 : index
    %0 = vector.load %arg2[%c0, %c0_0, %c0_1] : memref<1x9x64xf32, #tpu.memory_space<vmem>>, vector<1x8x64xf32>
    %1 = vector.shape_cast %0 : vector<1x8x64xf32> to vector<8x64xf32>
    %c0_2 = arith.constant 0 : index
    %c0_3 = arith.constant 0 : index
    %c0_4 = arith.constant 0 : index
    %2 = vector.load %arg1[%c0_2, %c0_3, %c0_4] : memref<1x9x64xf32, #tpu.memory_space<vmem>>, vector<1x8x64xf32>
    %3 = vector.shape_cast %2 : vector<1x8x64xf32> to vector<8x64xf32>
    %c0_5 = arith.constant 0 : index
    %c0_6 = arith.constant 0 : index
    %c0_7 = arith.constant 0 : index
    %4 = vector.load %arg3[%c0_5, %c0_6, %c0_7] : memref<3x64x64xf32, #tpu.memory_space<vmem>>, vector<1x64x64xf32>
    %5 = vector.shape_cast %4 : vector<1x64x64xf32> to vector<64x64xf32>
    %cst = arith.constant dense<0.000000e+00> : vector<8x64xf32>
    %6 = tpu.matmul %3, %5, %cst {dimension_numbers = #tpu.dot_dimension_numbers<[1], [0], [0], [1], [0, 0, 1, 1], [], []>} : vector<8x64xf32>, vector<64x64xf32>, vector<8x64xf32> -> vector<8x64xf32>
    %c1 = arith.constant 1 : index
    %c0_8 = arith.constant 0 : index
    %c0_9 = arith.constant 0 : index
    %7 = vector.load %arg3[%c1, %c0_8, %c0_9] : memref<3x64x64xf32, #tpu.memory_space<vmem>>, vector<1x64x64xf32>
    %8 = vector.shape_cast %7 : vector<1x64x64xf32> to vector<64x64xf32>
    %cst_10 = arith.constant dense<0.000000e+00> : vector<8x64xf32>
    %9 = tpu.matmul %1, %8, %cst_10 {dimension_numbers = #tpu.dot_dimension_numbers<[1], [0], [0], [1], [0, 0, 1, 1], [], []>} : vector<8x64xf32>, vector<64x64xf32>, vector<8x64xf32> -> vector<8x64xf32>
    %10 = arith.addf %6, %9 : vector<8x64xf32>
    %c0_11 = arith.constant 0 : index
    %c1_12 = arith.constant 1 : index
    %c0_13 = arith.constant 0 : index
    %11 = vector.load %arg1[%c0_11, %c1_12, %c0_13] : memref<1x9x64xf32, #tpu.memory_space<vmem>>, vector<1x8x64xf32>
    %12 = vector.shape_cast %11 : vector<1x8x64xf32> to vector<8x64xf32>
    %c2 = arith.constant 2 : index
    %c0_14 = arith.constant 0 : index
    %c0_15 = arith.constant 0 : index
    %13 = vector.load %arg3[%c2, %c0_14, %c0_15] : memref<3x64x64xf32, #tpu.memory_space<vmem>>, vector<1x64x64xf32>
    %14 = vector.shape_cast %13 : vector<1x64x64xf32> to vector<64x64xf32>
    %cst_16 = arith.constant dense<0.000000e+00> : vector<8x64xf32>
    %15 = tpu.matmul %12, %14, %cst_16 {dimension_numbers = #tpu.dot_dimension_numbers<[1], [0], [0], [1], [0, 0, 1, 1], [], []>} : vector<8x64xf32>, vector<64x64xf32>, vector<8x64xf32> -> vector<8x64xf32>
    %16 = arith.addf %10, %15 : vector<8x64xf32>
    %c0_17 = arith.constant 0 : index
    %c0_18 = arith.constant 0 : index
    %17 = vector.load %arg4[%c0_17, %c0_18] : memref<1x64xf32, #tpu.memory_space<vmem>>, vector<1x64xf32>
    %18 = vector.broadcast %17 : vector<1x64xf32> to vector<8x64xf32>
    %19 = arith.addf %16, %18 : vector<8x64xf32>
    %cst_19 = arith.constant 0.000000e+00 : f32
    %20 = vector.broadcast %cst_19 : f32 to vector<8x64xf32>
    %21 = arith.maximumf %19, %20 : vector<8x64xf32>
    %cst_20 = arith.constant 0.000000e+00 : f32
    %22 = vector.broadcast %cst_20 : f32 to vector<24x64xf32>
    %c0_21 = arith.constant 0 : index
    %c0_22 = arith.constant 0 : index
    %23 = vector.load %arg10[%c0_21, %c0_22] : memref<24x64xf32, #tpu.memory_space<vmem>>, vector<24x64xf32>
    tpu.vector_store %arg10[%c0_21, %c0_22], %22 {strides = array<i32>} : memref<24x64xf32, #tpu.memory_space<vmem>>, vector<24x64xf32>,
    %c8 = arith.constant 8 : index
    %c0_23 = arith.constant 0 : index
    %24 = vector.load %arg10[%c8, %c0_23] : memref<24x64xf32, #tpu.memory_space<vmem>>, vector<8x64xf32>
    tpu.vector_store %arg10[%c8, %c0_23], %21 {strides = array<i32>} : memref<24x64xf32, #tpu.memory_space<vmem>>, vector<8x64xf32>,
    %c7 = arith.constant 7 : index
    %c0_24 = arith.constant 0 : index
    %25 = vector.load %arg10[%c7, %c0_24] : memref<24x64xf32, #tpu.memory_space<vmem>>, vector<8x64xf32>
    %c0_25 = arith.constant 0 : index
    %c0_26 = arith.constant 0 : index
    %c0_27 = arith.constant 0 : index
    %26 = vector.load %arg5[%c0_25, %c0_26, %c0_27] : memref<3x64x64xf32, #tpu.memory_space<vmem>>, vector<1x64x64xf32>
    %27 = vector.shape_cast %26 : vector<1x64x64xf32> to vector<64x64xf32>
    %cst_28 = arith.constant dense<0.000000e+00> : vector<8x64xf32>
    %28 = tpu.matmul %25, %27, %cst_28 {dimension_numbers = #tpu.dot_dimension_numbers<[1], [0], [0], [1], [0, 0, 1, 1], [], []>} : vector<8x64xf32>, vector<64x64xf32>, vector<8x64xf32> -> vector<8x64xf32>
    %c8_29 = arith.constant 8 : index
    %c0_30 = arith.constant 0 : index
    %29 = vector.load %arg10[%c8_29, %c0_30] : memref<24x64xf32, #tpu.memory_space<vmem>>, vector<8x64xf32>
    %c1_31 = arith.constant 1 : index
    %c0_32 = arith.constant 0 : index
    %c0_33 = arith.constant 0 : index
    %30 = vector.load %arg5[%c1_31, %c0_32, %c0_33] : memref<3x64x64xf32, #tpu.memory_space<vmem>>, vector<1x64x64xf32>
    %31 = vector.shape_cast %30 : vector<1x64x64xf32> to vector<64x64xf32>
    %cst_34 = arith.constant dense<0.000000e+00> : vector<8x64xf32>
    %32 = tpu.matmul %29, %31, %cst_34 {dimension_numbers = #tpu.dot_dimension_numbers<[1], [0], [0], [1], [0, 0, 1, 1], [], []>} : vector<8x64xf32>, vector<64x64xf32>, vector<8x64xf32> -> vector<8x64xf32>
    %33 = arith.addf %28, %32 : vector<8x64xf32>
    %c9 = arith.constant 9 : index
    %c0_35 = arith.constant 0 : index
    %34 = vector.load %arg10[%c9, %c0_35] : memref<24x64xf32, #tpu.memory_space<vmem>>, vector<8x64xf32>
    %c2_36 = arith.constant 2 : index
    %c0_37 = arith.constant 0 : index
    %c0_38 = arith.constant 0 : index
    %35 = vector.load %arg5[%c2_36, %c0_37, %c0_38] : memref<3x64x64xf32, #tpu.memory_space<vmem>>, vector<1x64x64xf32>
    %36 = vector.shape_cast %35 : vector<1x64x64xf32> to vector<64x64xf32>
    %cst_39 = arith.constant dense<0.000000e+00> : vector<8x64xf32>
    %37 = tpu.matmul %34, %36, %cst_39 {dimension_numbers = #tpu.dot_dimension_numbers<[1], [0], [0], [1], [0, 0, 1, 1], [], []>} : vector<8x64xf32>, vector<64x64xf32>, vector<8x64xf32> -> vector<8x64xf32>
    %38 = arith.addf %33, %37 : vector<8x64xf32>
    %c0_40 = arith.constant 0 : index
    %c0_41 = arith.constant 0 : index
    %39 = vector.load %arg6[%c0_40, %c0_41] : memref<1x64xf32, #tpu.memory_space<vmem>>, vector<1x64xf32>
    %40 = vector.broadcast %39 : vector<1x64xf32> to vector<8x64xf32>
    %41 = arith.addf %38, %40 : vector<8x64xf32>
    %c0_42 = arith.constant 0 : index
    %c0_43 = arith.constant 0 : index
    %42 = vector.load %arg7[%c0_42, %c0_43] : memref<64x64xf32, #tpu.memory_space<vmem>>, vector<64x64xf32>
    %cst_44 = arith.constant dense<0.000000e+00> : vector<8x64xf32>
    %43 = tpu.matmul %1, %42, %cst_44 {dimension_numbers = #tpu.dot_dimension_numbers<[1], [0], [0], [1], [0, 0, 1, 1], [], []>} : vector<8x64xf32>, vector<64x64xf32>, vector<8x64xf32> -> vector<8x64xf32>
    %c0_45 = arith.constant 0 : index
    %c0_46 = arith.constant 0 : index
    %44 = vector.load %arg8[%c0_45, %c0_46] : memref<1x64xf32, #tpu.memory_space<vmem>>, vector<1x64xf32>
    %45 = vector.broadcast %44 : vector<1x64xf32> to vector<8x64xf32>
    %46 = arith.addf %43, %45 : vector<8x64xf32>
    %47 = arith.addf %41, %46 : vector<8x64xf32>
    %cst_47 = arith.constant 0.000000e+00 : f32
    %48 = vector.broadcast %cst_47 : f32 to vector<8x64xf32>
    %49 = arith.maximumf %47, %48 : vector<8x64xf32>
    %c0_48 = arith.constant 0 : index
    %c0_49 = arith.constant 0 : index
    %c0_50 = arith.constant 0 : index
    %50 = vector.load %arg9[%c0_48, %c0_49, %c0_50] : memref<1x8x64xf32, #tpu.memory_space<vmem>>, vector<1x8x64xf32>
    %51 = vector.shape_cast %50 : vector<1x8x64xf32> to vector<8x64xf32>
    %52 = vector.shape_cast %49 : vector<8x64xf32> to vector<1x8x64xf32>
    tpu.vector_store %arg9[%c0_48, %c0_49, %c0_50], %52 {strides = array<i32>} : memref<1x8x64xf32, #tpu.memory_space<vmem>>, vector<1x8x64xf32>,
    return
  }
  func.func @transform_0(%arg0: i32) -> (i32, i32, i32) {
    %c0_i32 = arith.constant 0 : i32
    %c0_i32_0 = arith.constant 0 : i32
    %c0_i32_1 = arith.constant 0 : i32
    return %arg0, %c0_i32, %c0_i32_0 : i32, i32, i32
  }
  func.func @transform_1(%arg0: i32) -> (i32, i32, i32) {
    %c0_i32 = arith.constant 0 : i32
    %c0_i32_0 = arith.constant 0 : i32
    %c0_i32_1 = arith.constant 0 : i32
    return %arg0, %c0_i32, %c0_i32_0 : i32, i32, i32
  }
  func.func @transform_2(%arg0: i32) -> (i32, i32, i32) {
    %c0_i32 = arith.constant 0 : i32
    %c0_i32_0 = arith.constant 0 : i32
    %c0_i32_1 = arith.constant 0 : i32
    %c0_i32_2 = arith.constant 0 : i32
    return %c0_i32, %c0_i32_0, %c0_i32_1 : i32, i32, i32
  }
  func.func @transform_3(%arg0: i32) -> (i32, i32) {
    %c0_i32 = arith.constant 0 : i32
    %c0_i32_0 = arith.constant 0 : i32
    %c0_i32_1 = arith.constant 0 : i32
    return %c0_i32, %c0_i32_0 : i32, i32
  }
  func.func @transform_4(%arg0: i32) -> (i32, i32, i32) {
    %c0_i32 = arith.constant 0 : i32
    %c0_i32_0 = arith.constant 0 : i32
    %c0_i32_1 = arith.constant 0 : i32
    %c0_i32_2 = arith.constant 0 : i32
    return %c0_i32, %c0_i32_0, %c0_i32_1 : i32, i32, i32
  }
  func.func @transform_5(%arg0: i32) -> (i32, i32) {
    %c0_i32 = arith.constant 0 : i32
    %c0_i32_0 = arith.constant 0 : i32
    %c0_i32_1 = arith.constant 0 : i32
    return %c0_i32, %c0_i32_0 : i32, i32
  }
  func.func @transform_6(%arg0: i32) -> (i32, i32) {
    %c0_i32 = arith.constant 0 : i32
    %c0_i32_0 = arith.constant 0 : i32
    %c0_i32_1 = arith.constant 0 : i32
    return %c0_i32, %c0_i32_0 : i32, i32
  }
  func.func @transform_7(%arg0: i32) -> (i32, i32) {
    %c0_i32 = arith.constant 0 : i32
    %c0_i32_0 = arith.constant 0 : i32
    %c0_i32_1 = arith.constant 0 : i32
    return %c0_i32, %c0_i32_0 : i32, i32
  }
  func.func @transform_8(%arg0: i32) -> (i32, i32, i32) {
    %c0_i32 = arith.constant 0 : i32
    %c0_i32_0 = arith.constant 0 : i32
    %c0_i32_1 = arith.constant 0 : i32
    return %arg0, %c0_i32, %c0_i32_0 : i32, i32, i32
  }
}

module attributes {stable_mosaic.version = 11 : i64} {
  func.func @_head_kernel(%arg0: i32, %arg1: memref<1x8x64xf32, #tpu.memory_space<vmem>>, %arg2: memref<1x64xf32, #tpu.memory_space<vmem>>, %arg3: memref<1x64xf32, #tpu.memory_space<vmem>>, %arg4: memref<1x64xf32, #tpu.memory_space<vmem>>, %arg5: memref<1x64xf32, #tpu.memory_space<vmem>>, %arg6: memref<64x2xf32, #tpu.memory_space<vmem>>, %arg7: memref<64x2xf32, #tpu.memory_space<vmem>>, %arg8: memref<1x2xf32, #tpu.memory_space<vmem>>, %arg9: memref<1x1x2xf32, #tpu.memory_space<vmem>>) attributes {dimension_semantics = [#tpu.dimension_semantics<parallel>], iteration_bounds = array<i64: 2>, scalar_prefetch = 0 : i64, scratch_operands = 0 : i64, tpu.core_type = #tpu.core_type<tc>, window_params = [{transform_indices = @transform_0, window_bounds = array<i64: 1, 8, 64>}, {pipeline_mode = #tpu.pipeline_mode<synchronous>, transform_indices = @transform_1, window_bounds = array<i64: 1, 64>}, {pipeline_mode = #tpu.pipeline_mode<synchronous>, transform_indices = @transform_2, window_bounds = array<i64: 1, 64>}, {pipeline_mode = #tpu.pipeline_mode<synchronous>, transform_indices = @transform_3, window_bounds = array<i64: 1, 64>}, {pipeline_mode = #tpu.pipeline_mode<synchronous>, transform_indices = @transform_4, window_bounds = array<i64: 1, 64>}, {pipeline_mode = #tpu.pipeline_mode<synchronous>, transform_indices = @transform_5, window_bounds = array<i64: 64, 2>}, {pipeline_mode = #tpu.pipeline_mode<synchronous>, transform_indices = @transform_6, window_bounds = array<i64: 64, 2>}, {pipeline_mode = #tpu.pipeline_mode<synchronous>, transform_indices = @transform_7, window_bounds = array<i64: 1, 2>}, {transform_indices = @transform_8, window_bounds = array<i64: 1, 1, 2>}]} {
    %c0 = arith.constant 0 : index
    %c0_0 = arith.constant 0 : index
    %c0_1 = arith.constant 0 : index
    %0 = vector.load %arg1[%c0, %c0_0, %c0_1] : memref<1x8x64xf32, #tpu.memory_space<vmem>>, vector<1x8x64xf32>
    %1 = vector.shape_cast %0 : vector<1x8x64xf32> to vector<8x64xf32>
    %cst = arith.constant dense<0xFF800000> : vector<64xf32>
    %2 = vector.multi_reduction <maximumf>, %1, %cst [0] : vector<8x64xf32> to vector<64xf32>
    %3 = vector.shape_cast %2 : vector<64xf32> to vector<1x64xf32>
    %cst_2 = arith.constant dense<0.000000e+00> : vector<64xf32>
    %4 = vector.multi_reduction <add>, %1, %cst_2 [0] : vector<8x64xf32> to vector<64xf32>
    %5 = vector.shape_cast %4 : vector<64xf32> to vector<1x64xf32>
    %c0_3 = arith.constant 0 : index
    %c0_4 = arith.constant 0 : index
    %6 = vector.load %arg2[%c0_3, %c0_4] : memref<1x64xf32, #tpu.memory_space<vmem>>, vector<1x64xf32>
    %7 = arith.mulf %3, %6 : vector<1x64xf32>
    %c0_5 = arith.constant 0 : index
    %c0_6 = arith.constant 0 : index
    %8 = vector.load %arg3[%c0_5, %c0_6] : memref<1x64xf32, #tpu.memory_space<vmem>>, vector<1x64xf32>
    %9 = arith.addf %7, %8 : vector<1x64xf32>
    %c0_7 = arith.constant 0 : index
    %c0_8 = arith.constant 0 : index
    %10 = vector.load %arg4[%c0_7, %c0_8] : memref<1x64xf32, #tpu.memory_space<vmem>>, vector<1x64xf32>
    %11 = arith.mulf %5, %10 : vector<1x64xf32>
    %c0_9 = arith.constant 0 : index
    %c0_10 = arith.constant 0 : index
    %12 = vector.load %arg5[%c0_9, %c0_10] : memref<1x64xf32, #tpu.memory_space<vmem>>, vector<1x64xf32>
    %13 = arith.addf %11, %12 : vector<1x64xf32>
    %c0_11 = arith.constant 0 : index
    %c0_12 = arith.constant 0 : index
    %14 = vector.load %arg6[%c0_11, %c0_12] : memref<64x2xf32, #tpu.memory_space<vmem>>, vector<64x2xf32>
    %cst_13 = arith.constant dense<0.000000e+00> : vector<1x2xf32>
    %15 = tpu.matmul %9, %14, %cst_13 {dimension_numbers = #tpu.dot_dimension_numbers<[1], [0], [0], [1], [0, 0, 1, 1], [], []>} : vector<1x64xf32>, vector<64x2xf32>, vector<1x2xf32> -> vector<1x2xf32>
    %c0_14 = arith.constant 0 : index
    %c0_15 = arith.constant 0 : index
    %16 = vector.load %arg7[%c0_14, %c0_15] : memref<64x2xf32, #tpu.memory_space<vmem>>, vector<64x2xf32>
    %cst_16 = arith.constant dense<0.000000e+00> : vector<1x2xf32>
    %17 = tpu.matmul %13, %16, %cst_16 {dimension_numbers = #tpu.dot_dimension_numbers<[1], [0], [0], [1], [0, 0, 1, 1], [], []>} : vector<1x64xf32>, vector<64x2xf32>, vector<1x2xf32> -> vector<1x2xf32>
    %18 = arith.addf %15, %17 : vector<1x2xf32>
    %c0_17 = arith.constant 0 : index
    %c0_18 = arith.constant 0 : index
    %19 = vector.load %arg8[%c0_17, %c0_18] : memref<1x2xf32, #tpu.memory_space<vmem>>, vector<1x2xf32>
    %20 = arith.addf %18, %19 : vector<1x2xf32>
    %c0_19 = arith.constant 0 : index
    %c0_20 = arith.constant 0 : index
    %c0_21 = arith.constant 0 : index
    %21 = vector.load %arg9[%c0_19, %c0_20, %c0_21] : memref<1x1x2xf32, #tpu.memory_space<vmem>>, vector<1x1x2xf32>
    %22 = vector.shape_cast %21 : vector<1x1x2xf32> to vector<1x2xf32>
    %23 = vector.shape_cast %20 : vector<1x2xf32> to vector<1x1x2xf32>
    tpu.vector_store %arg9[%c0_19, %c0_20, %c0_21], %23 {strides = array<i32>} : memref<1x1x2xf32, #tpu.memory_space<vmem>>, vector<1x1x2xf32>,
    return
  }
  func.func @transform_0(%arg0: i32) -> (i32, i32, i32) {
    %c0_i32 = arith.constant 0 : i32
    %c0_i32_0 = arith.constant 0 : i32
    %c0_i32_1 = arith.constant 0 : i32
    return %arg0, %c0_i32, %c0_i32_0 : i32, i32, i32
  }
  func.func @transform_1(%arg0: i32) -> (i32, i32) {
    %c0_i32 = arith.constant 0 : i32
    %c0_i32_0 = arith.constant 0 : i32
    %c0_i32_1 = arith.constant 0 : i32
    return %c0_i32, %c0_i32_0 : i32, i32
  }
  func.func @transform_2(%arg0: i32) -> (i32, i32) {
    %c0_i32 = arith.constant 0 : i32
    %c0_i32_0 = arith.constant 0 : i32
    %c0_i32_1 = arith.constant 0 : i32
    return %c0_i32, %c0_i32_0 : i32, i32
  }
  func.func @transform_3(%arg0: i32) -> (i32, i32) {
    %c0_i32 = arith.constant 0 : i32
    %c0_i32_0 = arith.constant 0 : i32
    %c0_i32_1 = arith.constant 0 : i32
    return %c0_i32, %c0_i32_0 : i32, i32
  }
  func.func @transform_4(%arg0: i32) -> (i32, i32) {
    %c0_i32 = arith.constant 0 : i32
    %c0_i32_0 = arith.constant 0 : i32
    %c0_i32_1 = arith.constant 0 : i32
    return %c0_i32, %c0_i32_0 : i32, i32
  }
  func.func @transform_5(%arg0: i32) -> (i32, i32) {
    %c0_i32 = arith.constant 0 : i32
    %c0_i32_0 = arith.constant 0 : i32
    %c0_i32_1 = arith.constant 0 : i32
    return %c0_i32, %c0_i32_0 : i32, i32
  }
  func.func @transform_6(%arg0: i32) -> (i32, i32) {
    %c0_i32 = arith.constant 0 : i32
    %c0_i32_0 = arith.constant 0 : i32
    %c0_i32_1 = arith.constant 0 : i32
    return %c0_i32, %c0_i32_0 : i32, i32
  }
  func.func @transform_7(%arg0: i32) -> (i32, i32) {
    %c0_i32 = arith.constant 0 : i32
    %c0_i32_0 = arith.constant 0 : i32
    %c0_i32_1 = arith.constant 0 : i32
    return %c0_i32, %c0_i32_0 : i32, i32
  }
  func.func @transform_8(%arg0: i32) -> (i32, i32, i32) {
    %c0_i32 = arith.constant 0 : i32
    %c0_i32_0 = arith.constant 0 : i32
    %c0_i32_1 = arith.constant 0 : i32
    return %arg0, %c0_i32, %c0_i32_0 : i32, i32, i32
  }
}

</mosaic_0001>

<llo_original>
// kernel: _lambda_.5
$region0: #{_lambda_.5}
  #allocation0 [shape = 'u32[]', space=smem, size = 0x4, offset = 0x4, fixed_abs, tag = 'smem constant byte address 0x4 - core index']
  #allocation1 [shape = 'u32[72,128]{1,0:T(1,128)}', space=vmem, size = 0x9000, scoped, tag = 'internal scratch']
  #allocation2 [shape = 'f32[32,64]{1,0:T(8,128)}', space=vmem, size = 0x4000, scoped, tag = 'scratch operand']
  %s0 = inlined_call_operand.vmem [shape: f32[2,18,64], index: 0, kind: input, shape index: {}]
  %s1 = inlined_call_operand.vmem [shape: f32[3,64,64], index: 1, kind: input, shape index: {}]
  %s2 = inlined_call_operand.vmem [shape: f32[1,64], index: 2, kind: input, shape index: {}]
  %s3 = inlined_call_operand.vmem [shape: f32[3,64,64], index: 3, kind: input, shape index: {}]
  %s4 = inlined_call_operand.vmem [shape: f32[1,64], index: 4, kind: input, shape index: {}]
  %s5 = inlined_call_operand.vmem [shape: f32[2,16,64], index: 5, kind: output, shape index: {}]
  %s6 = sld [smem:[#allocation0]]
  $region53: #{_lambda_.5} parent=0
    _
  %s8 = ssub.s32 1, %s6
  %s9 = scalar_select 0, %s8, %s6
  loop: start=0, step=1, limit=4
  $region2: #{_lambda_.5} parent=0 // loop_pre_header
    _
  $region3: #{_lambda_.5} parent=0 // loop_header
    %s11 = sphi 0, %s15
    %p12 = scmp.ge.s32.totalorder %s11, 4
    %s21 = sphi 0, %s23
    %s24 = sphi 0, %s21
    %s25 = sphi 0, %s24
    %s41 = sphi 0, %s25
    %s45 = sphi 0, %s45
    %s47 = sphi 0, %s45
    %s48 = sphi 0, %s47
    %s62 = sphi 0, %s48
    %s66 = sphi 0, %s66
    %s68 = sphi 0, %s66
    %s69 = sphi 0, %s68
    %s83 = sphi 0, %s69
    %s87 = sphi 0, %s87
    %s89 = sphi 0, %s87
    %s90 = sphi 0, %s89
    %s104 = sphi 0, %s90
    %s108 = sphi 0, %s108
    %s110 = sphi 0, %s108
    %s111 = sphi 0, %s110
    %s125 = sphi 0, %s111
    %s131 = sphi 0, %s133
    %s134 = sphi 0, %s131
    %s135 = sphi 0, %s134
    %s151 = sphi 0, %s135
  $region4: #{_lambda_.5} parent=0 // loop_header_branch
    %14 = sbr.rel (%p12) target = $region8
  $region5: #{_lambda_.5} parent=0 // loop_body
    %s16 = ssub.s32 %s11, 1
    %s17 = ssub.s32 %s11, 2
    %s18 = sadd.s32 %s11, 1
    %s19 = ssub.s32 %s11, %s18
    %p20 = scmp.eq.s32.totalorder %s19, 0
    %s22 = sadd.s32 %s21, 1
    %s23 = scalar_select %p20, %s21, %s22
    %p26 = pneg %p20
    %p27 = scmp.eq.s32.totalorder %s11, 1
    %p28 = por %p26, %p27
    %p29 = scmp.ne.s32.totalorder %s21, %s24
    %p30 = scmp.eq.s32.totalorder %s11, 0
    %p31 = por %p29, %p30
    %p32 = scmp.ne.s32.totalorder %s21, %s24
    %p33 = scmp.eq.s32.totalorder %s16, 1
    %p34 = por %p32, %p33
    %p35 = scmp.ne.s32.totalorder %s24, %s25
    %p36 = scmp.eq.s32.totalorder %s16, 0
    %p37 = por %p35, %p36
    %p38 = scmp.ne.s32.totalorder %s24, %s25
    %p39 = scmp.eq.s32.totalorder %s17, 1
    %p40 = por %p38, %p39
    %p42 = scmp.ne.s32.totalorder %s25, %s41
    %p43 = scmp.eq.s32.totalorder %s17, 0
    %p44 = por %p42, %p43
    %s46 = sadd.s32 %s45, 1
    %p49 = scmp.eq.s32.totalorder %s11, 1
    %p50 = scmp.ne.s32.totalorder %s45, %s47
    %p51 = scmp.eq.s32.totalorder %s11, 0
    %p52 = por %p50, %p51
    %p53 = scmp.ne.s32.totalorder %s45, %s47
    %p54 = scmp.eq.s32.totalorder %s16, 1
    %p55 = por %p53, %p54
    %p56 = scmp.ne.s32.totalorder %s47, %s48
    %p57 = scmp.eq.s32.totalorder %s16, 0
    %p58 = por %p56, %p57
    %p59 = scmp.ne.s32.totalorder %s47, %s48
    %p60 = scmp.eq.s32.totalorder %s17, 1
    %p61 = por %p59, %p60
    %p63 = scmp.ne.s32.totalorder %s48, %s62
    %p64 = scmp.eq.s32.totalorder %s17, 0
    %p65 = por %p63, %p64
    %s67 = sadd.s32 %s66, 1
    %p70 = scmp.eq.s32.totalorder %s11, 1
    %p71 = scmp.ne.s32.totalorder %s66, %s68
    %p72 = scmp.eq.s32.totalorder %s11, 0
    %p73 = por %p71, %p72
    %p74 = scmp.ne.s32.totalorder %s66, %s68
    %p75 = scmp.eq.s32.totalorder %s16, 1
    %p76 = por %p74, %p75
    %p77 = scmp.ne.s32.totalorder %s68, %s69
    %p78 = scmp.eq.s32.totalorder %s16, 0
    %p79 = por %p77, %p78
    %p80 = scmp.ne.s32.totalorder %s68, %s69
    %p81 = scmp.eq.s32.totalorder %s17, 1
    %p82 = por %p80, %p81
    %p84 = scmp.ne.s32.totalorder %s69, %s83
    %p85 = scmp.eq.s32.totalorder %s17, 0
    %p86 = por %p84, %p85
    %s88 = sadd.s32 %s87, 1
    %p91 = scmp.eq.s32.totalorder %s11, 1
    %p92 = scmp.ne.s32.totalorder %s87, %s89
    %p93 = scmp.eq.s32.totalorder %s11, 0
    %p94 = por %p92, %p93
    %p95 = scmp.ne.s32.totalorder %s87, %s89
    %p96 = scmp.eq.s32.totalorder %s16, 1
    %p97 = por %p95, %p96
    %p98 = scmp.ne.s32.totalorder %s89, %s90
    %p99 = scmp.eq.s32.totalorder %s16, 0
    %p100 = por %p98, %p99
    %p101 = scmp.ne.s32.totalorder %s89, %s90
    %p102 = scmp.eq.s32.totalorder %s17, 1
    %p103 = por %p101, %p102
    %p105 = scmp.ne.s32.totalorder %s90, %s104
    %p106 = scmp.eq.s32.totalorder %s17, 0
    %p107 = por %p105, %p106
    %s109 = sadd.s32 %s108, 1
    %p112 = scmp.eq.s32.totalorder %s11, 1
    %p113 = scmp.ne.s32.totalorder %s108, %s110
    %p114 = scmp.eq.s32.totalorder %s11, 0
    %p115 = por %p113, %p114
    %p116 = scmp.ne.s32.totalorder %s108, %s110
    %p117 = scmp.eq.s32.totalorder %s16, 1
    %p118 = por %p116, %p117
    %p119 = scmp.ne.s32.totalorder %s110, %s111
    %p120 = scmp.eq.s32.totalorder %s16, 0
    %p121 = por %p119, %p120
    %p122 = scmp.ne.s32.totalorder %s110, %s111
    %p123 = scmp.eq.s32.totalorder %s17, 1
    %p124 = por %p122, %p123
    %p126 = scmp.ne.s32.totalorder %s111, %s125
    %p127 = scmp.eq.s32.totalorder %s17, 0
    %p128 = por %p126, %p127
    %s129 = ssub.s32 %s11, %s18
    %p130 = scmp.eq.s32.totalorder %s129, 0
    %s132 = sadd.s32 %s131, 1
    %s133 = scalar_select %p130, %s131, %s132
    %p136 = pneg %p130
    %p137 = scmp.eq.s32.totalorder %s11, 1
    %p138 = por %p136, %p137
    %p139 = scmp.ne.s32.totalorder %s131, %s134
    %p140 = scmp.eq.s32.totalorder %s11, 0
    %p141 = por %p139, %p140
    %p142 = scmp.ne.s32.totalorder %s131, %s134
    %p143 = scmp.eq.s32.totalorder %s16, 1
    %p144 = por %p142, %p143
    %p145 = scmp.ne.s32.totalorder %s134, %s135
    %p146 = scmp.eq.s32.totalorder %s16, 0
    %p147 = por %p145, %p146
    %p148 = scmp.ne.s32.totalorder %s134, %s135
    %p149 = scmp.eq.s32.totalorder %s17, 1
    %p150 = por %p148, %p149
    %p152 = scmp.ne.s32.totalorder %s135, %s151
    %p153 = scmp.eq.s32.totalorder %s17, 0
    %p154 = por %p152, %p153
    %p155 = scmp.le.s32.totalorder 1, %s11
    %p156 = scmp.lt.s32.totalorder %s11, 3
    %p157 = pnand %p155, %p156
    %p158 = pneg %p157
    // Predicated region
    $region9: #{_lambda_.5} parent=5 // pred_check
      _
    $region10: #{_lambda_.5} parent=5 // pred_check_branch
      %160 = sbr.rel (%p157) target = $region12
    $region11: #{_lambda_.5} parent=5 // pred_region
      %s161 = ssub.s32 %s11, 1
      // Predicated region
      $region13: #{_lambda_.5} parent=11 // pred_check
        %p162 = pneg %p58
      $region14: #{_lambda_.5} parent=11 // pred_check_branch
        %164 = sbr.rel (%p162) target = $region16
      $region15: #{_lambda_.5} parent=11 // pred_region
        _
      $region16: #{_lambda_.5} parent=11 // pred_fallthru
        _
      // Predicated region
      $region17: #{_lambda_.5} parent=11 // pred_check
        %p165 = pneg %p79
      $region18: #{_lambda_.5} parent=11 // pred_check_branch
        %167 = sbr.rel (%p165) target = $region20
      $region19: #{_lambda_.5} parent=11 // pred_region
        _
      $region20: #{_lambda_.5} parent=11 // pred_fallthru
        _
      // Predicated region
      $region21: #{_lambda_.5} parent=11 // pred_check
        %p168 = pneg %p100
      $region22: #{_lambda_.5} parent=11 // pred_check_branch
        %170 = sbr.rel (%p168) target = $region24
      $region23: #{_lambda_.5} parent=11 // pred_region
        _
      $region24: #{_lambda_.5} parent=11 // pred_fallthru
        _
      // Predicated region
      $region25: #{_lambda_.5} parent=11 // pred_check
        %p171 = pneg %p121
      $region26: #{_lambda_.5} parent=11 // pred_check_branch
        %173 = sbr.rel (%p171) target = $region28
      $region27: #{_lambda_.5} parent=11 // pred_region
        _
      $region28: #{_lambda_.5} parent=11 // pred_fallthru
        _
    $region12: #{_lambda_.5} parent=5 // pred_fallthru
      _
    %p174 = scmp.lt.s32.totalorder %s11, 2
    // Predicated region
    $region29: #{_lambda_.5} parent=5 // pred_check
      %p175 = pneg %p174
    $region30: #{_lambda_.5} parent=5 // pred_check_branch
      %177 = sbr.rel (%p175) target = $region32
    $region31: #{_lambda_.5} parent=5 // pred_region
      // Predicated region
      $region33: #{_lambda_.5} parent=31 // pred_check
        %p178 = pneg %p31
      $region34: #{_lambda_.5} parent=31 // pred_check_branch
        %180 = sbr.rel (%p178) target = $region36
      $region35: #{_lambda_.5} parent=31 // pred_region
        %p181 = scmp.lt.s32.totalorder %s11, 1
        %s182 = scalar_select %p181, %s11, 1
        %s183 = smul.addr %s182, 3
        %s184 = smul.addr %s183, 8
        %s185 = scalar_lea.vmem %s0, %s184
      $region36: #{_lambda_.5} parent=31 // pred_fallthru
        _
    $region32: #{_lambda_.5} parent=5 // pred_fallthru
      _
    %p186 = scmp.le.s32.totalorder 1, %s11
    %p187 = scmp.lt.s32.totalorder %s11, 3
    %p188 = pnand %p186, %p187
    %p189 = pneg %p188
    // Predicated region
    $region37: #{_lambda_.5} parent=5 // pred_check
      _
    $region38: #{_lambda_.5} parent=5 // pred_check_branch
      %191 = sbr.rel (%p188) target = $region40
    $region39: #{_lambda_.5} parent=5 // pred_region
      %s192 = ssub.s32 %s11, 1
      %p193 = scmp.lt.s32.totalorder %s16, 1
      %s194 = scalar_select %p193, %s16, 1
      %s195 = smul.addr %s194, 3
      %s196 = smul.addr %s195, 8
      %s197 = scalar_lea.vmem %s0, %s196
      %p198 = pneg %p37
      %p199 = pneg %p34
      %p200 = pneg %p58
      %p201 = pneg %p55
      %p202 = pneg %p79
      %p203 = pneg %p76
      %p204 = pneg %p100
      %p205 = pneg %p97
      %p206 = pneg %p121
      %p207 = pneg %p118
      %p208 = pneg %p147
      %p209 = pneg %p144
      %p210 = scmp.lt.s32.totalorder %s16, 1
      %s211 = scalar_select %p210, %s16, 1
      %s212 = smul.addr %s211, 2
      %s213 = smul.addr %s212, 8
      %s214 = scalar_lea.vmem %s5, %s213
      %p215 = scmp.lt.s32.totalorder %s16, 1
      %s216 = scalar_select %p215, %s16, 1
      %s217 = smul.addr %s216, 3
      %s218 = smul.addr %s217, 8
      %s219 = scalar_lea.vmem %s0, %s218
      %p220 = scmp.lt.s32.totalorder %s16, 1
      %s221 = scalar_select %p220, %s16, 1
      %s222 = smul.addr %s221, 2
      %s223 = smul.addr %s222, 8
      %s224 = scalar_lea.vmem %s5, %s223
      %v225 = vld [vmem:[%s219] sm:$0xff]
      %v226 = vld [vmem:[%s219 + $0x8] sm:$0xff]
      %v227 = vld [vmem:[%s1] sm:$0xff]
      %v228 = vld [vmem:[%s1 + $0x8] sm:$0xff]
      %v229 = vld [vmem:[%s1 + $0x10] sm:$0xff]
      %v230 = vld [vmem:[%s1 + $0x18] sm:$0xff]
      %v231 = vld [vmem:[%s1 + $0x20] sm:$0xff]
      %v232 = vld [vmem:[%s1 + $0x28] sm:$0xff]
      %v233 = vld [vmem:[%s1 + $0x30] sm:$0xff]
      %v234 = vld [vmem:[%s1 + $0x38] sm:$0xff]
      %v235 = vld [vmem:[%s219 + $0x1] sm:$0xff]
      %v236 = vld [vmem:[%s219 + $0x9] sm:$0xff]
      %s237 = scalar_lea.vmem %s1, 64
      %v238 = vld [vmem:[%s237] sm:$0xff]
      %v239 = vld [vmem:[%s237 + $0x8] sm:$0xff]
      %v240 = vld [vmem:[%s237 + $0x10] sm:$0xff]
      %v241 = vld [vmem:[%s237 + $0x18] sm:$0xff]
      %v242 = vld [vmem:[%s237 + $0x20] sm:$0xff]
      %v243 = vld [vmem:[%s237 + $0x28] sm:$0xff]
      %v244 = vld [vmem:[%s237 + $0x30] sm:$0xff]
      %v245 = vld [vmem:[%s237 + $0x38] sm:$0xff]
      %vm246 = vcmask 523264
      %v248 = vsel %vm246, %v235, 0
      %v251 = vsel %vm246, %v236, 0
      %253 = vmatpush.msra.mxu0 0.0
      %254 = vmatpush.msra.mxu0 0.0
      %255 = vmatpush.msra.mxu0 0.0
      %256 = vmatpush.msra.mxu0 0.0
      %257 = vmatpush.msra.mxu0 0.0
      %258 = vmatpush.msra.mxu0 0.0
      %259 = vmatpush.msra.mxu0 0.0
      %260 = vmatpush.msra.mxu0 0.0
      %261 = vmatpush.msra.mxu0 %v245
      %262 = vmatpush.msra.mxu0 %v244
      %263 = vmatpush.msra.mxu0 %v243
      %264 = vmatpush.msra.mxu0 %v242
      %265 = vmatpush.msra.mxu0 %v241
      %266 = vmatpush.msra.mxu0 %v240
      %267 = vmatpush.msra.mxu0 %v239
      %268 = vmatpush.msra.mxu0 %v238
      %269 = vmatmul.f32.gmra.mxu0 %v248
      %v270 = vpop.f32.mrf.mxu0
      %v271 = vadd.f32 0.0, %v270
      %272 = vmatmul.f32.gmra.mxu0 %v251
      %v273 = vpop.f32.mrf.mxu0
      %v274 = vadd.f32 0.0, %v273
      %275 = vdwg.mxu0
      %v277 = vsel %vm246, %v225, 0
      %v280 = vsel %vm246, %v226, 0
      %282 = vmatpush.msra.mxu0 0.0
      %283 = vmatpush.msra.mxu0 0.0
      %284 = vmatpush.msra.mxu0 0.0
      %285 = vmatpush.msra.mxu0 0.0
      %286 = vmatpush.msra.mxu0 0.0
      %287 = vmatpush.msra.mxu0 0.0
      %288 = vmatpush.msra.mxu0 0.0
      %289 = vmatpush.msra.mxu0 0.0
      %290 = vmatpush.msra.mxu0 %v234
      %291 = vmatpush.msra.mxu0 %v233
      %292 = vmatpush.msra.mxu0 %v232
      %293 = vmatpush.msra.mxu0 %v231
      %294 = vmatpush.msra.mxu0 %v230
      %295 = vmatpush.msra.mxu0 %v229
      %296 = vmatpush.msra.mxu0 %v228
      %297 = vmatpush.msra.mxu0 %v227
      %298 = vmatmul.f32.gmra.mxu0 %v277
      %v299 = vpop.f32.mrf.mxu0
      %v300 = vadd.f32 %v271, %v299
      %301 = vmatmul.f32.gmra.mxu0 %v280
      %v302 = vpop.f32.mrf.mxu0
      %v303 = vadd.f32 %v274, %v302
      %304 = vdwg.mxu0
      %v305 = vld [vmem:[%s219 + $0x2] sm:$0xff]
      %v306 = vld [vmem:[%s219 + $0xa] sm:$0xff]
      %s307 = scalar_lea.vmem %s1, 128
      %v308 = vld [vmem:[%s307] sm:$0xff]
      %v309 = vld [vmem:[%s307 + $0x8] sm:$0xff]
      %v310 = vld [vmem:[%s307 + $0x10] sm:$0xff]
      %v311 = vld [vmem:[%s307 + $0x18] sm:$0xff]
      %v312 = vld [vmem:[%s307 + $0x20] sm:$0xff]
      %v313 = vld [vmem:[%s307 + $0x28] sm:$0xff]
      %v314 = vld [vmem:[%s307 + $0x30] sm:$0xff]
      %v315 = vld [vmem:[%s307 + $0x38] sm:$0xff]
      %v317 = vsel %vm246, %v305, 0
      %v320 = vsel %vm246, %v306, 0
      %322 = vmatpush.msra.mxu0 0.0
      %323 = vmatpush.msra.mxu0 0.0
      %324 = vmatpush.msra.mxu0 0.0
      %325 = vmatpush.msra.mxu0 0.0
      %326 = vmatpush.msra.mxu0 0.0
      %327 = vmatpush.msra.mxu0 0.0
      %328 = vmatpush.msra.mxu0 0.0
      %329 = vmatpush.msra.mxu0 0.0
      %330 = vmatpush.msra.mxu0 %v315
      %331 = vmatpush.msra.mxu0 %v314
      %332 = vmatpush.msra.mxu0 %v313
      %333 = vmatpush.msra.mxu0 %v312
      %334 = vmatpush.msra.mxu0 %v311
      %335 = vmatpush.msra.mxu0 %v310
      %336 = vmatpush.msra.mxu0 %v309
      %337 = vmatpush.msra.mxu0 %v308
      %338 = vmatmul.f32.gmra.mxu0 %v317
      %v339 = vpop.f32.mrf.mxu0
      %v340 = vadd.f32 0.0, %v339
      %341 = vmatmul.f32.gmra.mxu0 %v320
      %v342 = vpop.f32.mrf.mxu0
      %v343 = vadd.f32 0.0, %v342
      %344 = vdwg.mxu0
      %v345 = vadd.f32 %v300, %v340
      %v346 = vadd.f32 %v303, %v343
      %v347 = vld [vmem:[%s2] sm:$0x1]
      %v349 = vperm.slane %v347, 0
      %v351 = vadd.f32 %v345, %v349
      %v352 = vadd.f32 %v346, %v349
      %v353 = vmax.f32 %v351, 0.0
      %v354 = vmax.f32 %v352, 0.0
      %355 = vst.msk [vmem:[#allocation2] sm:$0xff] %vm246, 0.0
      %356 = vst.msk [vmem:[#allocation2 + $0x8] sm:$0xff] %vm246, 0.0
      %357 = vst.msk [vmem:[#allocation2 + $0x10] sm:$0xff] %vm246, 0.0
      %358 = vst.msk [vmem:[#allocation2 + $0x18] sm:$0xff] %vm246, 0.0
      %359 = vst.msk [vmem:[#allocation2 + $0x8] sm:$0xff] %vm246, %v353
      %360 = vst.msk [vmem:[#allocation2 + $0x10] sm:$0xff] %vm246, %v354
      %v361 = vld [vmem:[#allocation2 + $0x7] sm:$0xff]
      %v362 = vld [vmem:[#allocation2 + $0xf] sm:$0xff]
      %v363 = vld [vmem:[%s3] sm:$0xff]
      %v364 = vld [vmem:[%s3 + $0x8] sm:$0xff]
      %v365 = vld [vmem:[%s3 + $0x10] sm:$0xff]
      %v366 = vld [vmem:[%s3 + $0x18] sm:$0xff]
      %v367 = vld [vmem:[%s3 + $0x20] sm:$0xff]
      %v368 = vld [vmem:[%s3 + $0x28] sm:$0xff]
      %v369 = vld [vmem:[%s3 + $0x30] sm:$0xff]
      %v370 = vld [vmem:[%s3 + $0x38] sm:$0xff]
      %v371 = vld [vmem:[#allocation2 + $0x8] sm:$0xff]
      %v372 = vld [vmem:[#allocation2 + $0x10] sm:$0xff]
      %s373 = scalar_lea.vmem %s3, 64
      %v374 = vld [vmem:[%s373] sm:$0xff]
      %v375 = vld [vmem:[%s373 + $0x8] sm:$0xff]
      %v376 = vld [vmem:[%s373 + $0x10] sm:$0xff]
      %v377 = vld [vmem:[%s373 + $0x18] sm:$0xff]
      %v378 = vld [vmem:[%s373 + $0x20] sm:$0xff]
      %v379 = vld [vmem:[%s373 + $0x28] sm:$0xff]
      %v380 = vld [vmem:[%s373 + $0x30] sm:$0xff]
      %v381 = vld [vmem:[%s373 + $0x38] sm:$0xff]
      %v383 = vsel %vm246, %v371, 0
      %v386 = vsel %vm246, %v372, 0
      %388 = vmatpush.msra.mxu0 0.0
      %389 = vmatpush.msra.mxu0 0.0
      %390 = vmatpush.msra.mxu0 0.0
      %391 = vmatpush.msra.mxu0 0.0
      %392 = vmatpush.msra.mxu0 0.0
      %393 = vmatpush.msra.mxu0 0.0
      %394 = vmatpush.msra.mxu0 0.0
      %395 = vmatpush.msra.mxu0 0.0
      %396 = vmatpush.msra.mxu0 %v381
      %397 = vmatpush.msra.mxu0 %v380
      %398 = vmatpush.msra.mxu0 %v379
      %399 = vmatpush.msra.mxu0 %v378
      %400 = vmatpush.msra.mxu0 %v377
      %401 = vmatpush.msra.mxu0 %v376
      %402 = vmatpush.msra.mxu0 %v375
      %403 = vmatpush.msra.mxu0 %v374
      %404 = vmatmul.f32.gmra.mxu0 %v383
      %v405 = vpop.f32.mrf.mxu0
      %v406 = vadd.f32 0.0, %v405
      %407 = vmatmul.f32.gmra.mxu0 %v386
      %v408 = vpop.f32.mrf.mxu0
      %v409 = vadd.f32 0.0, %v408
      %410 = vdwg.mxu0
      %v412 = vsel %vm246, %v361, 0
      %v415 = vsel %vm246, %v362, 0
      %417 = vmatpush.msra.mxu0 0.0
      %418 = vmatpush.msra.mxu0 0.0
      %419 = vmatpush.msra.mxu0 0.0
      %420 = vmatpush.msra.mxu0 0.0
      %421 = vmatpush.msra.mxu0 0.0
      %422 = vmatpush.msra.mxu0 0.0
      %423 = vmatpush.msra.mxu0 0.0
      %424 = vmatpush.msra.mxu0 0.0
      %425 = vmatpush.msra.mxu0 %v370
      %426 = vmatpush.msra.mxu0 %v369
      %427 = vmatpush.msra.mxu0 %v368
      %428 = vmatpush.msra.mxu0 %v367
      %429 = vmatpush.msra.mxu0 %v366
      %430 = vmatpush.msra.mxu0 %v365
      %431 = vmatpush.msra.mxu0 %v364
      %432 = vmatpush.msra.mxu0 %v363
      %433 = vmatmul.f32.gmra.mxu0 %v412
      %v434 = vpop.f32.mrf.mxu0
      %v435 = vadd.f32 %v406, %v434
      %436 = vmatmul.f32.gmra.mxu0 %v415
      %v437 = vpop.f32.mrf.mxu0
      %v438 = vadd.f32 %v409, %v437
      %439 = vdwg.mxu0
      %v440 = vld [vmem:[#allocation2 + $0x9] sm:$0xff]
      %v441 = vld [vmem:[#allocation2 + $0x11] sm:$0xff]
      %s442 = scalar_lea.vmem %s3, 128
      %v443 = vld [vmem:[%s442] sm:$0xff]
      %v444 = vld [vmem:[%s442 + $0x8] sm:$0xff]
      %v445 = vld [vmem:[%s442 + $0x10] sm:$0xff]
      %v446 = vld [vmem:[%s442 + $0x18] sm:$0xff]
      %v447 = vld [vmem:[%s442 + $0x20] sm:$0xff]
      %v448 = vld [vmem:[%s442 + $0x28] sm:$0xff]
      %v449 = vld [vmem:[%s442 + $0x30] sm:$0xff]
      %v450 = vld [vmem:[%s442 + $0x38] sm:$0xff]
      %v452 = vsel %vm246, %v440, 0
      %v455 = vsel %vm246, %v441, 0
      %457 = vmatpush.msra.mxu0 0.0
      %458 = vmatpush.msra.mxu0 0.0
      %459 = vmatpush.msra.mxu0 0.0
      %460 = vmatpush.msra.mxu0 0.0
      %461 = vmatpush.msra.mxu0 0.0
      %462 = vmatpush.msra.mxu0 0.0
      %463 = vmatpush.msra.mxu0 0.0
      %464 = vmatpush.msra.mxu0 0.0
      %465 = vmatpush.msra.mxu0 %v450
      %466 = vmatpush.msra.mxu0 %v449
      %467 = vmatpush.msra.mxu0 %v448
      %468 = vmatpush.msra.mxu0 %v447
      %469 = vmatpush.msra.mxu0 %v446
      %470 = vmatpush.msra.mxu0 %v445
      %471 = vmatpush.msra.mxu0 %v444
      %472 = vmatpush.msra.mxu0 %v443
      %473 = vmatmul.f32.gmra.mxu0 %v452
      %v474 = vpop.f32.mrf.mxu0
      %v475 = vadd.f32 0.0, %v474
      %476 = vmatmul.f32.gmra.mxu0 %v455
      %v477 = vpop.f32.mrf.mxu0
      %v478 = vadd.f32 0.0, %v477
      %479 = vdwg.mxu0
      %v480 = vadd.f32 %v435, %v475
      %v481 = vadd.f32 %v438, %v478
      %v482 = vld [vmem:[%s4] sm:$0x1]
      %v484 = vperm.slane %v482, 0
      %v486 = vadd.f32 %v480, %v484
      %v487 = vadd.f32 %v481, %v484
      %v488 = vld [vmem:[%s219 + $0x1] sm:$0xff]
      %v489 = vld [vmem:[%s219 + $0x9] sm:$0xff]
      %v490 = vadd.f32 %v486, %v488
      %v491 = vadd.f32 %v487, %v489
      %v492 = vmax.f32 %v490, 0.0
      %v493 = vmax.f32 %v491, 0.0
      %494 = vst.msk [vmem:[%s224] sm:$0xff] %vm246, %v492
      %495 = vst.msk [vmem:[%s224 + $0x8] sm:$0xff] %vm246, %v493
      %p496 = scmp.lt.s32.totalorder %s16, 1
      %s497 = scalar_select %p496, %s16, 1
      %s498 = smul.addr %s497, 2
      %s499 = smul.addr %s498, 8
      %s500 = scalar_lea.vmem %s5, %s499
      // Predicated region
      $region41: #{_lambda_.5} parent=39 // pred_check
        %p501 = pneg %p144
      $region42: #{_lambda_.5} parent=39 // pred_check_branch
        %503 = sbr.rel (%p501) target = $region44
      $region43: #{_lambda_.5} parent=39 // pred_region
        _
      $region44: #{_lambda_.5} parent=39 // pred_fallthru
        _
    $region40: #{_lambda_.5} parent=5 // pred_fallthru
      _
    %p504 = scmp.le.s32.totalorder 2, %s11
    // Predicated region
    $region45: #{_lambda_.5} parent=5 // pred_check
      %p505 = pneg %p504
    $region46: #{_lambda_.5} parent=5 // pred_check_branch
      %507 = sbr.rel (%p505) target = $region48
    $region47: #{_lambda_.5} parent=5 // pred_region
      %s508 = ssub.s32 %s11, 2
      // Predicated region
      $region49: #{_lambda_.5} parent=47 // pred_check
        %p509 = pneg %p150
      $region50: #{_lambda_.5} parent=47 // pred_check_branch
        %511 = sbr.rel (%p509) target = $region52
      $region51: #{_lambda_.5} parent=47 // pred_region
        %p512 = scmp.lt.s32.totalorder %s17, 1
        %s513 = scalar_select %p512, %s17, 1
        %s514 = smul.addr %s513, 2
        %s515 = smul.addr %s514, 8
        %s516 = scalar_lea.vmem %s5, %s515
      $region52: #{_lambda_.5} parent=47 // pred_fallthru
        _
    $region48: #{_lambda_.5} parent=5 // pred_fallthru
      _
  $region6: #{_lambda_.5} parent=0 // loop_footer
    %s15 = sadd.s32 1, %s11
  $region7: #{_lambda_.5} parent=0 // loop_footer_branch
    %10 = sbr.rel target = $region3
  $region8: #{_lambda_.5} parent=0 // loop_exit
    _

// kernel: _lambda_.4
$region0: #{_lambda_.4}
  #allocation0 [shape = 'u32[]', space=smem, size = 0x4, offset = 0x4, fixed_abs, tag = 'smem constant byte address 0x4 - core index']
  #allocation1 [shape = 'u32[72,128]{1,0:T(1,128)}', space=vmem, size = 0x9000, scoped, tag = 'internal scratch']
  #allocation2 [shape = 'f32[24,64]{1,0:T(8,128)}', space=vmem, size = 0x3000, scoped, tag = 'scratch operand']
  %s0 = inlined_call_operand.vmem [shape: f32[2,16,9], index: 0, kind: input, shape index: {}]
  %s1 = inlined_call_operand.vmem [shape: f32[2,16,9], index: 1, kind: input, shape index: {}]
  %s2 = inlined_call_operand.vmem [shape: f32[9,64], index: 2, kind: input, shape index: {}]
  %s3 = inlined_call_operand.vmem [shape: f32[1,64], index: 3, kind: input, shape index: {}]
  %s4 = inlined_call_operand.vmem [shape: f32[2,16,64], index: 4, kind: output, shape index: {}]
  %s5 = sld [smem:[#allocation0]]
  $region49: #{_lambda_.4} parent=0
    _
  %s7 = ssub.s32 1, %s5
  %s8 = scalar_select 0, %s7, %s5
  loop: start=0, step=1, limit=4
  $region2: #{_lambda_.4} parent=0 // loop_pre_header
    _
  $region3: #{_lambda_.4} parent=0 // loop_header
    %s10 = sphi 0, %s14
    %p11 = scmp.ge.s32.totalorder %s10, 4
    %s20 = sphi 0, %s22
    %s23 = sphi 0, %s20
    %s24 = sphi 0, %s23
    %s40 = sphi 0, %s24
    %s46 = sphi 0, %s48
    %s49 = sphi 0, %s46
    %s50 = sphi 0, %s49
    %s66 = sphi 0, %s50
    %s70 = sphi 0, %s70
    %s72 = sphi 0, %s70
    %s73 = sphi 0, %s72
    %s87 = sphi 0, %s73
    %s91 = sphi 0, %s91
    %s93 = sphi 0, %s91
    %s94 = sphi 0, %s93
    %s108 = sphi 0, %s94
    %s114 = sphi 0, %s116
    %s117 = sphi 0, %s114
    %s118 = sphi 0, %s117
    %s134 = sphi 0, %s118
  $region4: #{_lambda_.4} parent=0 // loop_header_branch
    %13 = sbr.rel (%p11) target = $region8
  $region5: #{_lambda_.4} parent=0 // loop_body
    %s15 = ssub.s32 %s10, 1
    %s16 = ssub.s32 %s10, 2
    %s17 = sadd.s32 %s10, 1
    %s18 = ssub.s32 %s10, %s17
    %p19 = scmp.eq.s32.totalorder %s18, 0
    %s21 = sadd.s32 %s20, 1
    %s22 = scalar_select %p19, %s20, %s21
    %p25 = pneg %p19
    %p26 = scmp.eq.s32.totalorder %s10, 1
    %p27 = por %p25, %p26
    %p28 = scmp.ne.s32.totalorder %s20, %s23
    %p29 = scmp.eq.s32.totalorder %s10, 0
    %p30 = por %p28, %p29
    %p31 = scmp.ne.s32.totalorder %s20, %s23
    %p32 = scmp.eq.s32.totalorder %s15, 1
    %p33 = por %p31, %p32
    %p34 = scmp.ne.s32.totalorder %s23, %s24
    %p35 = scmp.eq.s32.totalorder %s15, 0
    %p36 = por %p34, %p35
    %p37 = scmp.ne.s32.totalorder %s23, %s24
    %p38 = scmp.eq.s32.totalorder %s16, 1
    %p39 = por %p37, %p38
    %p41 = scmp.ne.s32.totalorder %s24, %s40
    %p42 = scmp.eq.s32.totalorder %s16, 0
    %p43 = por %p41, %p42
    %s44 = ssub.s32 %s10, %s17
    %p45 = scmp.eq.s32.totalorder %s44, 0
    %s47 = sadd.s32 %s46, 1
    %s48 = scalar_select %p45, %s46, %s47
    %p51 = pneg %p45
    %p52 = scmp.eq.s32.totalorder %s10, 1
    %p53 = por %p51, %p52
    %p54 = scmp.ne.s32.totalorder %s46, %s49
    %p55 = scmp.eq.s32.totalorder %s10, 0
    %p56 = por %p54, %p55
    %p57 = scmp.ne.s32.totalorder %s46, %s49
    %p58 = scmp.eq.s32.totalorder %s15, 1
    %p59 = por %p57, %p58
    %p60 = scmp.ne.s32.totalorder %s49, %s50
    %p61 = scmp.eq.s32.totalorder %s15, 0
    %p62 = por %p60, %p61
    %p63 = scmp.ne.s32.totalorder %s49, %s50
    %p64 = scmp.eq.s32.totalorder %s16, 1
    %p65 = por %p63, %p64
    %p67 = scmp.ne.s32.totalorder %s50, %s66
    %p68 = scmp.eq.s32.totalorder %s16, 0
    %p69 = por %p67, %p68
    %s71 = sadd.s32 %s70, 1
    %p74 = scmp.eq.s32.totalorder %s10, 1
    %p75 = scmp.ne.s32.totalorder %s70, %s72
    %p76 = scmp.eq.s32.totalorder %s10, 0
    %p77 = por %p75, %p76
    %p78 = scmp.ne.s32.totalorder %s70, %s72
    %p79 = scmp.eq.s32.totalorder %s15, 1
    %p80 = por %p78, %p79
    %p81 = scmp.ne.s32.totalorder %s72, %s73
    %p82 = scmp.eq.s32.totalorder %s15, 0
    %p83 = por %p81, %p82
    %p84 = scmp.ne.s32.totalorder %s72, %s73
    %p85 = scmp.eq.s32.totalorder %s16, 1
    %p86 = por %p84, %p85
    %p88 = scmp.ne.s32.totalorder %s73, %s87
    %p89 = scmp.eq.s32.totalorder %s16, 0
    %p90 = por %p88, %p89
    %s92 = sadd.s32 %s91, 1
    %p95 = scmp.eq.s32.totalorder %s10, 1
    %p96 = scmp.ne.s32.totalorder %s91, %s93
    %p97 = scmp.eq.s32.totalorder %s10, 0
    %p98 = por %p96, %p97
    %p99 = scmp.ne.s32.totalorder %s91, %s93
    %p100 = scmp.eq.s32.totalorder %s15, 1
    %p101 = por %p99, %p100
    %p102 = scmp.ne.s32.totalorder %s93, %s94
    %p103 = scmp.eq.s32.totalorder %s15, 0
    %p104 = por %p102, %p103
    %p105 = scmp.ne.s32.totalorder %s93, %s94
    %p106 = scmp.eq.s32.totalorder %s16, 1
    %p107 = por %p105, %p106
    %p109 = scmp.ne.s32.totalorder %s94, %s108
    %p110 = scmp.eq.s32.totalorder %s16, 0
    %p111 = por %p109, %p110
    %s112 = ssub.s32 %s10, %s17
    %p113 = scmp.eq.s32.totalorder %s112, 0
    %s115 = sadd.s32 %s114, 1
    %s116 = scalar_select %p113, %s114, %s115
    %p119 = pneg %p113
    %p120 = scmp.eq.s32.totalorder %s10, 1
    %p121 = por %p119, %p120
    %p122 = scmp.ne.s32.totalorder %s114, %s117
    %p123 = scmp.eq.s32.totalorder %s10, 0
    %p124 = por %p122, %p123
    %p125 = scmp.ne.s32.totalorder %s114, %s117
    %p126 = scmp.eq.s32.totalorder %s15, 1
    %p127 = por %p125, %p126
    %p128 = scmp.ne.s32.totalorder %s117, %s118
    %p129 = scmp.eq.s32.totalorder %s15, 0
    %p130 = por %p128, %p129
    %p131 = scmp.ne.s32.totalorder %s117, %s118
    %p132 = scmp.eq.s32.totalorder %s16, 1
    %p133 = por %p131, %p132
    %p135 = scmp.ne.s32.totalorder %s118, %s134
    %p136 = scmp.eq.s32.totalorder %s16, 0
    %p137 = por %p135, %p136
    %p138 = scmp.le.s32.totalorder 1, %s10
    %p139 = scmp.lt.s32.totalorder %s10, 3
    %p140 = pnand %p138, %p139
    %p141 = pneg %p140
    // Predicated region
    $region9: #{_lambda_.4} parent=5 // pred_check
      _
    $region10: #{_lambda_.4} parent=5 // pred_check_branch
      %143 = sbr.rel (%p140) target = $region12
    $region11: #{_lambda_.4} parent=5 // pred_region
      %s144 = ssub.s32 %s10, 1
      // Predicated region
      $region13: #{_lambda_.4} parent=11 // pred_check
        %p145 = pneg %p83
      $region14: #{_lambda_.4} parent=11 // pred_check_branch
        %147 = sbr.rel (%p145) target = $region16
      $region15: #{_lambda_.4} parent=11 // pred_region
        _
      $region16: #{_lambda_.4} parent=11 // pred_fallthru
        _
      // Predicated region
      $region17: #{_lambda_.4} parent=11 // pred_check
        %p148 = pneg %p104
      $region18: #{_lambda_.4} parent=11 // pred_check_branch
        %150 = sbr.rel (%p148) target = $region20
      $region19: #{_lambda_.4} parent=11 // pred_region
        _
      $region20: #{_lambda_.4} parent=11 // pred_fallthru
        _
    $region12: #{_lambda_.4} parent=5 // pred_fallthru
      _
    %p151 = scmp.lt.s32.totalorder %s10, 2
    // Predicated region
    $region21: #{_lambda_.4} parent=5 // pred_check
      %p152 = pneg %p151
    $region22: #{_lambda_.4} parent=5 // pred_check_branch
      %154 = sbr.rel (%p152) target = $region24
    $region23: #{_lambda_.4} parent=5 // pred_region
      // Predicated region
      $region25: #{_lambda_.4} parent=23 // pred_check
        %p155 = pneg %p30
      $region26: #{_lambda_.4} parent=23 // pred_check_branch
        %157 = sbr.rel (%p155) target = $region28
      $region27: #{_lambda_.4} parent=23 // pred_region
        %p158 = scmp.lt.s32.totalorder %s10, 1
        %s159 = scalar_select %p158, %s10, 1
        %s160 = smul.addr %s159, 2
        %s161 = smul.addr %s160, 8
        %s162 = scalar_lea.vmem %s0, %s161
      $region28: #{_lambda_.4} parent=23 // pred_fallthru
        _
      // Predicated region
      $region29: #{_lambda_.4} parent=23 // pred_check
        %p163 = pneg %p56
      $region30: #{_lambda_.4} parent=23 // pred_check_branch
        %165 = sbr.rel (%p163) target = $region32
      $region31: #{_lambda_.4} parent=23 // pred_region
        %p166 = scmp.lt.s32.totalorder %s10, 1
        %s167 = scalar_select %p166, %s10, 1
        %s168 = smul.addr %s167, 2
        %s169 = smul.addr %s168, 8
        %s170 = scalar_lea.vmem %s1, %s169
      $region32: #{_lambda_.4} parent=23 // pred_fallthru
        _
    $region24: #{_lambda_.4} parent=5 // pred_fallthru
      _
    %p171 = scmp.le.s32.totalorder 1, %s10
    %p172 = scmp.lt.s32.totalorder %s10, 3
    %p173 = pnand %p171, %p172
    %p174 = pneg %p173
    // Predicated region
    $region33: #{_lambda_.4} parent=5 // pred_check
      _
    $region34: #{_lambda_.4} parent=5 // pred_check_branch
      %176 = sbr.rel (%p173) target = $region36
    $region35: #{_lambda_.4} parent=5 // pred_region
      %s177 = ssub.s32 %s10, 1
      %p178 = scmp.lt.s32.totalorder %s15, 1
      %s179 = scalar_select %p178, %s15, 1
      %s180 = smul.addr %s179, 2
      %s181 = smul.addr %s180, 8
      %s182 = scalar_lea.vmem %s0, %s181
      %p183 = pneg %p36
      %p184 = pneg %p33
      %p185 = scmp.lt.s32.totalorder %s15, 1
      %s186 = scalar_select %p185, %s15, 1
      %s187 = smul.addr %s186, 2
      %s188 = smul.addr %s187, 8
      %s189 = scalar_lea.vmem %s1, %s188
      %p190 = pneg %p62
      %p191 = pneg %p59
      %p192 = pneg %p83
      %p193 = pneg %p80
      %p194 = pneg %p104
      %p195 = pneg %p101
      %p196 = pneg %p130
      %p197 = pneg %p127
      %p198 = scmp.lt.s32.totalorder %s15, 1
      %s199 = scalar_select %p198, %s15, 1
      %s200 = smul.addr %s199, 2
      %s201 = smul.addr %s200, 8
      %s202 = scalar_lea.vmem %s4, %s201
      %p203 = scmp.lt.s32.totalorder %s15, 1
      %s204 = scalar_select %p203, %s15, 1
      %s205 = smul.addr %s204, 2
      %s206 = smul.addr %s205, 8
      %s207 = scalar_lea.vmem %s0, %s206
      %p208 = scmp.lt.s32.totalorder %s15, 1
      %s209 = scalar_select %p208, %s15, 1
      %s210 = smul.addr %s209, 2
      %s211 = smul.addr %s210, 8
      %s212 = scalar_lea.vmem %s1, %s211
      %p213 = scmp.lt.s32.totalorder %s15, 1
      %s214 = scalar_select %p213, %s15, 1
      %s215 = smul.addr %s214, 2
      %s216 = smul.addr %s215, 8
      %s217 = scalar_lea.vmem %s4, %s216
      %v218 = vld [vmem:[%s207] sm:$0xff]
      %v219 = vld [vmem:[%s207 + $0x8] sm:$0xff]
      %v220 = vld [vmem:[%s2] sm:$0xff]
      %v221 = vld [vmem:[%s2 + $0x8] sm:$0x1]
      %v222 = vld [vmem:[%s3] sm:$0x1]
      %v224 = vperm.slane %v222, 0
      %vm226 = vcmask 72704
      %v228 = vsel %vm226, %v218, 0
      %v231 = vsel %vm226, %v219, 0
      %vm233 = vcmask 1040384
      %v235 = vsel %vm233, %v221, 0
      %237 = vmatpush.msra.mxu0 0.0
      %238 = vmatpush.msra.mxu0 0.0
      %239 = vmatpush.msra.mxu0 0.0
      %240 = vmatpush.msra.mxu0 0.0
      %241 = vmatpush.msra.mxu0 0.0
      %242 = vmatpush.msra.mxu0 0.0
      %243 = vmatpush.msra.mxu0 0.0
      %244 = vmatpush.msra.mxu0 0.0
      %245 = vmatpush.msra.mxu0 0.0
      %246 = vmatpush.msra.mxu0 0.0
      %247 = vmatpush.msra.mxu0 0.0
      %248 = vmatpush.msra.mxu0 0.0
      %249 = vmatpush.msra.mxu0 0.0
      %250 = vmatpush.msra.mxu0 0.0
      %251 = vmatpush.msra.mxu0 %v235
      %252 = vmatpush.msra.mxu0 %v220
      %253 = vmatmul.f32.gmra.mxu0 %v228
      %v254 = vpop.f32.mrf.mxu0
      %v255 = vadd.f32 %v224, %v254
      %256 = vmatmul.f32.gmra.mxu0 %v231
      %v257 = vpop.f32.mrf.mxu0
      %v258 = vadd.f32 %v224, %v257
      %259 = vdwg.mxu0
      %v260 = vmax.f32 %v255, 0.0
      %v261 = vmax.f32 %v258, 0.0
      %v262 = vld [vmem:[%s212] sm:$0xff]
      %v263 = vld [vmem:[%s212 + $0x8] sm:$0xff]
      %v265 = vsel %vm226, %v262, 0
      %v268 = vsel %vm226, %v263, 0
      %270 = vmatpush.msra.mxu0 0.0
      %271 = vmatpush.msra.mxu0 0.0
      %272 = vmatpush.msra.mxu0 0.0
      %273 = vmatpush.msra.mxu0 0.0
      %274 = vmatpush.msra.mxu0 0.0
      %275 = vmatpush.msra.mxu0 0.0
      %276 = vmatpush.msra.mxu0 0.0
      %277 = vmatpush.msra.mxu0 0.0
      %278 = vmatpush.msra.mxu0 0.0
      %279 = vmatpush.msra.mxu0 0.0
      %280 = vmatpush.msra.mxu0 0.0
      %281 = vmatpush.msra.mxu0 0.0
      %282 = vmatpush.msra.mxu0 0.0
      %283 = vmatpush.msra.mxu0 0.0
      %284 = vmatpush.msra.mxu0 %v235
      %285 = vmatpush.msra.mxu0 %v220
      %286 = vmatmul.f32.gmra.mxu0 %v265
      %v287 = vpop.f32.mrf.mxu0
      %v288 = vadd.f32 %v224, %v287
      %289 = vmatmul.f32.gmra.mxu0 %v268
      %v290 = vpop.f32.mrf.mxu0
      %v291 = vadd.f32 %v224, %v290
      %292 = vdwg.mxu0
      %v293 = vmax.f32 %v288, 0.0
      %v294 = vmax.f32 %v291, 0.0
      %vm295 = vcmask 523264
      %296 = vst.msk [vmem:[#allocation2] sm:$0xff] %vm295, 0.0
      %297 = vst.msk [vmem:[#allocation2 + $0x8] sm:$0xff] %vm295, 0.0
      %298 = vst.msk [vmem:[#allocation2 + $0x10] sm:$0xff] %vm295, 0.0
      %299 = vst.msk [vmem:[#allocation2 + $0x8] sm:$0xff] %vm295, %v293
      %300 = vst.msk [vmem:[#allocation2 + $0x10] sm:$0xff] %vm295, %v294
      %v301 = vld [vmem:[#allocation2 + $0x7] sm:$0xff]
      %v302 = vld [vmem:[#allocation2 + $0xf] sm:$0xff]
      %v303 = vmax.f32 %v260, %v301
      %v304 = vmax.f32 %v261, %v302
      %v305 = vld [vmem:[#allocation2 + $0x8] sm:$0xff]
      %v306 = vld [vmem:[#allocation2 + $0x10] sm:$0xff]
      %v307 = vmax.f32 %v303, %v305
      %v308 = vmax.f32 %v304, %v306
      %309 = vst.msk [vmem:[%s217] sm:$0xff] %vm295, %v307
      %310 = vst.msk [vmem:[%s217 + $0x8] sm:$0xff] %vm295, %v308
      %p311 = scmp.lt.s32.totalorder %s15, 1
      %s312 = scalar_select %p311, %s15, 1
      %s313 = smul.addr %s312, 2
      %s314 = smul.addr %s313, 8
      %s315 = scalar_lea.vmem %s4, %s314
      // Predicated region
      $region37: #{_lambda_.4} parent=35 // pred_check
        %p316 = pneg %p127
      $region38: #{_lambda_.4} parent=35 // pred_check_branch
        %318 = sbr.rel (%p316) target = $region40
      $region39: #{_lambda_.4} parent=35 // pred_region
        _
      $region40: #{_lambda_.4} parent=35 // pred_fallthru
        _
    $region36: #{_lambda_.4} parent=5 // pred_fallthru
      _
    %p319 = scmp.le.s32.totalorder 2, %s10
    // Predicated region
    $region41: #{_lambda_.4} parent=5 // pred_check
      %p320 = pneg %p319
    $region42: #{_lambda_.4} parent=5 // pred_check_branch
      %322 = sbr.rel (%p320) target = $region44
    $region43: #{_lambda_.4} parent=5 // pred_region
      %s323 = ssub.s32 %s10, 2
      // Predicated region
      $region45: #{_lambda_.4} parent=43 // pred_check
        %p324 = pneg %p133
      $region46: #{_lambda_.4} parent=43 // pred_check_branch
        %326 = sbr.rel (%p324) target = $region48
      $region47: #{_lambda_.4} parent=43 // pred_region
        %p327 = scmp.lt.s32.totalorder %s16, 1
        %s328 = scalar_select %p327, %s16, 1
        %s329 = smul.addr %s328, 2
        %s330 = smul.addr %s329, 8
        %s331 = scalar_lea.vmem %s4, %s330
      $region48: #{_lambda_.4} parent=43 // pred_fallthru
        _
    $region44: #{_lambda_.4} parent=5 // pred_fallthru
      _
  $region6: #{_lambda_.4} parent=0 // loop_footer
    %s14 = sadd.s32 1, %s10
  $region7: #{_lambda_.4} parent=0 // loop_footer_branch
    %9 = sbr.rel target = $region3
  $region8: #{_lambda_.4} parent=0 // loop_exit
    _

// kernel: _lambda_.7
$region0: #{_lambda_.7}
  #allocation0 [shape = 'u32[]', space=smem, size = 0x4, offset = 0x4, fixed_abs, tag = 'smem constant byte address 0x4 - core index']
  #allocation1 [shape = 'u32[72,128]{1,0:T(1,128)}', space=vmem, size = 0x9000, scoped, tag = 'internal scratch']
  %s0 = inlined_call_operand.vmem [shape: f32[2,8,64], index: 0, kind: input, shape index: {}]
  %s1 = inlined_call_operand.vmem [shape: f32[1,64], index: 1, kind: input, shape index: {}]
  %s2 = inlined_call_operand.vmem [shape: f32[1,64], index: 2, kind: input, shape index: {}]
  %s3 = inlined_call_operand.vmem [shape: f32[1,64], index: 3, kind: input, shape index: {}]
  %s4 = inlined_call_operand.vmem [shape: f32[1,64], index: 4, kind: input, shape index: {}]
  %s5 = inlined_call_operand.vmem [shape: f32[64,2], index: 5, kind: input, shape index: {}]
  %s6 = inlined_call_operand.vmem [shape: f32[64,2], index: 6, kind: input, shape index: {}]
  %s7 = inlined_call_operand.vmem [shape: f32[1,2], index: 7, kind: input, shape index: {}]
  %s8 = inlined_call_operand.hbm [shape: f32[2,1,2], index: 8, kind: output, shape index: {}]
  %s9 = sld [smem:[#allocation0]]
  $region65: #{_lambda_.7} parent=0
    _
  %s11 = ssub.s32 1, %s9
  %s12 = scalar_select 0, %s11, %s9
  $region1: #{_lambda_.7} parent=0
    #allocation2 [shape = 'u8[1024]{0}', space=vmem, size = 0x400, scoped, tag = 'output window, operand 0']
    #allocation3 [shape = 's32[2]{0}', space=sflag, size = 0x8, scoped, tag = 'scoped memory for _lambda_.7']
    %13 = vsyncpa [#allocation3], 0
    %s14 = scalar_lea.sflag [#allocation3], 1
    %15 = vsyncpa %s14, 0
    loop: start=0, step=1, limit=4
    $region2: #{_lambda_.7} parent=1 // loop_pre_header
      _
    $region3: #{_lambda_.7} parent=1 // loop_header
      %s17 = sphi 0, %s21
      %p18 = scmp.ge.s32.totalorder %s17, 4
      %s27 = sphi 0, %s29
      %s30 = sphi 0, %s27
      %s31 = sphi 0, %s30
      %s47 = sphi 0, %s31
      %s51 = sphi 0, %s51
      %s53 = sphi 0, %s51
      %s54 = sphi 0, %s53
      %s68 = sphi 0, %s54
      %s72 = sphi 0, %s72
      %s74 = sphi 0, %s72
      %s75 = sphi 0, %s74
      %s89 = sphi 0, %s75
      %s93 = sphi 0, %s93
      %s95 = sphi 0, %s93
      %s96 = sphi 0, %s95
      %s110 = sphi 0, %s96
      %s114 = sphi 0, %s114
      %s116 = sphi 0, %s114
      %s117 = sphi 0, %s116
      %s131 = sphi 0, %s117
      %s135 = sphi 0, %s135
      %s137 = sphi 0, %s135
      %s138 = sphi 0, %s137
      %s152 = sphi 0, %s138
      %s156 = sphi 0, %s156
      %s158 = sphi 0, %s156
      %s159 = sphi 0, %s158
      %s173 = sphi 0, %s159
      %s177 = sphi 0, %s177
      %s179 = sphi 0, %s177
      %s180 = sphi 0, %s179
      %s194 = sphi 0, %s180
      %s200 = sphi 0, %s202
      %s203 = sphi 0, %s200
      %s204 = sphi 0, %s203
      %s220 = sphi 0, %s204
    $region4: #{_lambda_.7} parent=1 // loop_header_branch
      %20 = sbr.rel (%p18) target = $region8
    $region5: #{_lambda_.7} parent=1 // loop_body
      %s22 = ssub.s32 %s17, 1
      %s23 = ssub.s32 %s17, 2
      %s24 = sadd.s32 %s17, 1
      %s25 = ssub.s32 %s17, %s24
      %p26 = scmp.eq.s32.totalorder %s25, 0
      %s28 = sadd.s32 %s27, 1
      %s29 = scalar_select %p26, %s27, %s28
      %p32 = pneg %p26
      %p33 = scmp.eq.s32.totalorder %s17, 1
      %p34 = por %p32, %p33
      %p35 = scmp.ne.s32.totalorder %s27, %s30
      %p36 = scmp.eq.s32.totalorder %s17, 0
      %p37 = por %p35, %p36
      %p38 = scmp.ne.s32.totalorder %s27, %s30
      %p39 = scmp.eq.s32.totalorder %s22, 1
      %p40 = por %p38, %p39
      %p41 = scmp.ne.s32.totalorder %s30, %s31
      %p42 = scmp.eq.s32.totalorder %s22, 0
      %p43 = por %p41, %p42
      %p44 = scmp.ne.s32.totalorder %s30, %s31
      %p45 = scmp.eq.s32.totalorder %s23, 1
      %p46 = por %p44, %p45
      %p48 = scmp.ne.s32.totalorder %s31, %s47
      %p49 = scmp.eq.s32.totalorder %s23, 0
      %p50 = por %p48, %p49
      %s52 = sadd.s32 %s51, 1
      %p55 = scmp.eq.s32.totalorder %s17, 1
      %p56 = scmp.ne.s32.totalorder %s51, %s53
      %p57 = scmp.eq.s32.totalorder %s17, 0
      %p58 = por %p56, %p57
      %p59 = scmp.ne.s32.totalorder %s51, %s53
      %p60 = scmp.eq.s32.totalorder %s22, 1
      %p61 = por %p59, %p60
      %p62 = scmp.ne.s32.totalorder %s53, %s54
      %p63 = scmp.eq.s32.totalorder %s22, 0
      %p64 = por %p62, %p63
      %p65 = scmp.ne.s32.totalorder %s53, %s54
      %p66 = scmp.eq.s32.totalorder %s23, 1
      %p67 = por %p65, %p66
      %p69 = scmp.ne.s32.totalorder %s54, %s68
      %p70 = scmp.eq.s32.totalorder %s23, 0
      %p71 = por %p69, %p70
      %s73 = sadd.s32 %s72, 1
      %p76 = scmp.eq.s32.totalorder %s17, 1
      %p77 = scmp.ne.s32.totalorder %s72, %s74
      %p78 = scmp.eq.s32.totalorder %s17, 0
      %p79 = por %p77, %p78
      %p80 = scmp.ne.s32.totalorder %s72, %s74
      %p81 = scmp.eq.s32.totalorder %s22, 1
      %p82 = por %p80, %p81
      %p83 = scmp.ne.s32.totalorder %s74, %s75
      %p84 = scmp.eq.s32.totalorder %s22, 0
      %p85 = por %p83, %p84
      %p86 = scmp.ne.s32.totalorder %s74, %s75
      %p87 = scmp.eq.s32.totalorder %s23, 1
      %p88 = por %p86, %p87
      %p90 = scmp.ne.s32.totalorder %s75, %s89
      %p91 = scmp.eq.s32.totalorder %s23, 0
      %p92 = por %p90, %p91
      %s94 = sadd.s32 %s93, 1
      %p97 = scmp.eq.s32.totalorder %s17, 1
      %p98 = scmp.ne.s32.totalorder %s93, %s95
      %p99 = scmp.eq.s32.totalorder %s17, 0
      %p100 = por %p98, %p99
      %p101 = scmp.ne.s32.totalorder %s93, %s95
      %p102 = scmp.eq.s32.totalorder %s22, 1
      %p103 = por %p101, %p102
      %p104 = scmp.ne.s32.totalorder %s95, %s96
      %p105 = scmp.eq.s32.totalorder %s22, 0
      %p106 = por %p104, %p105
      %p107 = scmp.ne.s32.totalorder %s95, %s96
      %p108 = scmp.eq.s32.totalorder %s23, 1
      %p109 = por %p107, %p108
      %p111 = scmp.ne.s32.totalorder %s96, %s110
      %p112 = scmp.eq.s32.totalorder %s23, 0
      %p113 = por %p111, %p112
      %s115 = sadd.s32 %s114, 1
      %p118 = scmp.eq.s32.totalorder %s17, 1
      %p119 = scmp.ne.s32.totalorder %s114, %s116
      %p120 = scmp.eq.s32.totalorder %s17, 0
      %p121 = por %p119, %p120
      %p122 = scmp.ne.s32.totalorder %s114, %s116
      %p123 = scmp.eq.s32.totalorder %s22, 1
      %p124 = por %p122, %p123
      %p125 = scmp.ne.s32.totalorder %s116, %s117
      %p126 = scmp.eq.s32.totalorder %s22, 0
      %p127 = por %p125, %p126
      %p128 = scmp.ne.s32.totalorder %s116, %s117
      %p129 = scmp.eq.s32.totalorder %s23, 1
      %p130 = por %p128, %p129
      %p132 = scmp.ne.s32.totalorder %s117, %s131
      %p133 = scmp.eq.s32.totalorder %s23, 0
      %p134 = por %p132, %p133
      %s136 = sadd.s32 %s135, 1
      %p139 = scmp.eq.s32.totalorder %s17, 1
      %p140 = scmp.ne.s32.totalorder %s135, %s137
      %p141 = scmp.eq.s32.totalorder %s17, 0
      %p142 = por %p140, %p141
      %p143 = scmp.ne.s32.totalorder %s135, %s137
      %p144 = scmp.eq.s32.totalorder %s22, 1
      %p145 = por %p143, %p144
      %p146 = scmp.ne.s32.totalorder %s137, %s138
      %p147 = scmp.eq.s32.totalorder %s22, 0
      %p148 = por %p146, %p147
      %p149 = scmp.ne.s32.totalorder %s137, %s138
      %p150 = scmp.eq.s32.totalorder %s23, 1
      %p151 = por %p149, %p150
      %p153 = scmp.ne.s32.totalorder %s138, %s152
      %p154 = scmp.eq.s32.totalorder %s23, 0
      %p155 = por %p153, %p154
      %s157 = sadd.s32 %s156, 1
      %p160 = scmp.eq.s32.totalorder %s17, 1
      %p161 = scmp.ne.s32.totalorder %s156, %s158
      %p162 = scmp.eq.s32.totalorder %s17, 0
      %p163 = por %p161, %p162
      %p164 = scmp.ne.s32.totalorder %s156, %s158
      %p165 = scmp.eq.s32.totalorder %s22, 1
      %p166 = por %p164, %p165
      %p167 = scmp.ne.s32.totalorder %s158, %s159
      %p168 = scmp.eq.s32.totalorder %s22, 0
      %p169 = por %p167, %p168
      %p170 = scmp.ne.s32.totalorder %s158, %s159
      %p171 = scmp.eq.s32.totalorder %s23, 1
      %p172 = por %p170, %p171
      %p174 = scmp.ne.s32.totalorder %s159, %s173
      %p175 = scmp.eq.s32.totalorder %s23, 0
      %p176 = por %p174, %p175
      %s178 = sadd.s32 %s177, 1
      %p181 = scmp.eq.s32.totalorder %s17, 1
      %p182 = scmp.ne.s32.totalorder %s177, %s179
      %p183 = scmp.eq.s32.totalorder %s17, 0
      %p184 = por %p182, %p183
      %p185 = scmp.ne.s32.totalorder %s177, %s179
      %p186 = scmp.eq.s32.totalorder %s22, 1
      %p187 = por %p185, %p186
      %p188 = scmp.ne.s32.totalorder %s179, %s180
      %p189 = scmp.eq.s32.totalorder %s22, 0
      %p190 = por %p188, %p189
      %p191 = scmp.ne.s32.totalorder %s179, %s180
      %p192 = scmp.eq.s32.totalorder %s23, 1
      %p193 = por %p191, %p192
      %p195 = scmp.ne.s32.totalorder %s180, %s194
      %p196 = scmp.eq.s32.totalorder %s23, 0
      %p197 = por %p195, %p196
      %s198 = ssub.s32 %s17, %s24
      %p199 = scmp.eq.s32.totalorder %s198, 0
      %s201 = sadd.s32 %s200, 1
      %s202 = scalar_select %p199, %s200, %s201
      %p205 = pneg %p199
      %p206 = scmp.eq.s32.totalorder %s17, 1
      %p207 = por %p205, %p206
      %p208 = scmp.ne.s32.totalorder %s200, %s203
      %p209 = scmp.eq.s32.totalorder %s17, 0
      %p210 = por %p208, %p209
      %p211 = scmp.ne.s32.totalorder %s200, %s203
      %p212 = scmp.eq.s32.totalorder %s22, 1
      %p213 = por %p211, %p212
      %p214 = scmp.ne.s32.totalorder %s203, %s204
      %p215 = scmp.eq.s32.totalorder %s22, 0
      %p216 = por %p214, %p215
      %p217 = scmp.ne.s32.totalorder %s203, %s204
      %p218 = scmp.eq.s32.totalorder %s23, 1
      %p219 = por %p217, %p218
      %p221 = scmp.ne.s32.totalorder %s204, %s220
      %p222 = scmp.eq.s32.totalorder %s23, 0
      %p223 = por %p221, %p222
      %p224 = scmp.le.s32.totalorder 1, %s17
      %p225 = scmp.lt.s32.totalorder %s17, 3
      %p226 = pnand %p224, %p225
      %p227 = pneg %p226
      // Predicated region
      $region9: #{_lambda_.7} parent=5 // pred_check
        _
      $region10: #{_lambda_.7} parent=5 // pred_check_branch
        %229 = sbr.rel (%p226) target = $region12
      $region11: #{_lambda_.7} parent=5 // pred_region
        %s230 = ssub.s32 %s17, 1
        // Predicated region
        $region13: #{_lambda_.7} parent=11 // pred_check
          %p231 = pneg %p64
        $region14: #{_lambda_.7} parent=11 // pred_check_branch
          %233 = sbr.rel (%p231) target = $region16
        $region15: #{_lambda_.7} parent=11 // pred_region
          _
        $region16: #{_lambda_.7} parent=11 // pred_fallthru
          _
        // Predicated region
        $region17: #{_lambda_.7} parent=11 // pred_check
          %p234 = pneg %p85
        $region18: #{_lambda_.7} parent=11 // pred_check_branch
          %236 = sbr.rel (%p234) target = $region20
        $region19: #{_lambda_.7} parent=11 // pred_region
          _
        $region20: #{_lambda_.7} parent=11 // pred_fallthru
          _
        // Predicated region
        $region21: #{_lambda_.7} parent=11 // pred_check
          %p237 = pneg %p106
        $region22: #{_lambda_.7} parent=11 // pred_check_branch
          %239 = sbr.rel (%p237) target = $region24
        $region23: #{_lambda_.7} parent=11 // pred_region
          _
        $region24: #{_lambda_.7} parent=11 // pred_fallthru
          _
        // Predicated region
        $region25: #{_lambda_.7} parent=11 // pred_check
          %p240 = pneg %p127
        $region26: #{_lambda_.7} parent=11 // pred_check_branch
          %242 = sbr.rel (%p240) target = $region28
        $region27: #{_lambda_.7} parent=11 // pred_region
          _
        $region28: #{_lambda_.7} parent=11 // pred_fallthru
          _
        // Predicated region
        $region29: #{_lambda_.7} parent=11 // pred_check
          %p243 = pneg %p148
        $region30: #{_lambda_.7} parent=11 // pred_check_branch
          %245 = sbr.rel (%p243) target = $region32
        $region31: #{_lambda_.7} parent=11 // pred_region
          _
        $region32: #{_lambda_.7} parent=11 // pred_fallthru
          _
        // Predicated region
        $region33: #{_lambda_.7} parent=11 // pred_check
          %p246 = pneg %p169
        $region34: #{_lambda_.7} parent=11 // pred_check_branch
          %248 = sbr.rel (%p246) target = $region36
        $region35: #{_lambda_.7} parent=11 // pred_region
          _
        $region36: #{_lambda_.7} parent=11 // pred_fallthru
          _
        // Predicated region
        $region37: #{_lambda_.7} parent=11 // pred_check
          %p249 = pneg %p190
        $region38: #{_lambda_.7} parent=11 // pred_check_branch
          %251 = sbr.rel (%p249) target = $region40
        $region39: #{_lambda_.7} parent=11 // pred_region
          _
        $region40: #{_lambda_.7} parent=11 // pred_fallthru
          _
      $region12: #{_lambda_.7} parent=5 // pred_fallthru
        _
      %p252 = scmp.lt.s32.totalorder %s17, 2
      // Predicated region
      $region41: #{_lambda_.7} parent=5 // pred_check
        %p253 = pneg %p252
      $region42: #{_lambda_.7} parent=5 // pred_check_branch
        %255 = sbr.rel (%p253) target = $region44
      $region43: #{_lambda_.7} parent=5 // pred_region
        // Predicated region
        $region45: #{_lambda_.7} parent=43 // pred_check
          %p256 = pneg %p37
        $region46: #{_lambda_.7} parent=43 // pred_check_branch
          %258 = sbr.rel (%p256) target = $region48
        $region47: #{_lambda_.7} parent=43 // pred_region
          %p259 = scmp.lt.s32.totalorder %s17, 1
          %s260 = scalar_select %p259, %s17, 1
          %s261 = smul.addr %s260, 8
          %s262 = scalar_lea.vmem %s0, %s261
        $region48: #{_lambda_.7} parent=43 // pred_fallthru
          _
      $region44: #{_lambda_.7} parent=5 // pred_fallthru
        _
      %p263 = scmp.le.s32.totalorder 1, %s17
      %p264 = scmp.lt.s32.totalorder %s17, 3
      %p265 = pnand %p263, %p264
      %p266 = pneg %p265
      // Predicated region
      $region49: #{_lambda_.7} parent=5 // pred_check
        _
      $region50: #{_lambda_.7} parent=5 // pred_check_branch
        %268 = sbr.rel (%p265) target = $region52
      $region51: #{_lambda_.7} parent=5 // pred_region
        %s269 = ssub.s32 %s17, 1
        %p270 = scmp.lt.s32.totalorder %s22, 1
        %s271 = scalar_select %p270, %s22, 1
        %s272 = smul.addr %s271, 8
        %s273 = scalar_lea.vmem %s0, %s272
        %p274 = pneg %p43
        %p275 = pneg %p40
        %p276 = pneg %p64
        %p277 = pneg %p61
        %p278 = pneg %p85
        %p279 = pneg %p82
        %p280 = pneg %p106
        %p281 = pneg %p103
        %p282 = pneg %p127
        %p283 = pneg %p124
        %p284 = pneg %p148
        %p285 = pneg %p145
        %p286 = pneg %p169
        %p287 = pneg %p166
        %p288 = pneg %p190
        %p289 = pneg %p187
        %p290 = pneg %p216
        %p291 = pneg %p213
        %s292 = sand.u32 %s203, 1
        %s293 = scalar_lea.sflag [#allocation3], %s292
        %s294 = sand.u32 %s203, 1
        %s295 = scalar_lea.vmem [#allocation2], %s294
        %p296 = scmp.lt.s32.totalorder %s22, 1
        %s297 = scalar_select %p296, %s22, 1
        %s298 = smul.addr %s297, 8
        %s299 = scalar_lea.vmem %s0, %s298
        %v300 = vld [vmem:[%s299] sm:$0xff]
        %vm301 = vcmask 523264
        %v302 = vsel %vm301, %v300, -inf
        %v303 = vrot.slane %v302, 4
        %v304 = vmax.f32 %v302, %v303
        %v305 = vrot.slane %v304, 2
        %v306 = vmax.f32 %v304, %v305
        %v307 = vrot.slane %v306, 1
        %v308 = vmax.f32 %v306, %v307
        %v309 = vsel %vm301, %v300, 0.0
        %v310 = vrot.slane %v309, 4
        %v311 = vadd.f32 %v309, %v310
        %v312 = vrot.slane %v311, 2
        %v313 = vadd.f32 %v311, %v312
        %v314 = vrot.slane %v313, 1
        %v315 = vadd.f32 %v313, %v314
        %v316 = vld [vmem:[%s1] sm:$0x1]
        %v317 = vmul.f32 %v308, %v316
        %v318 = vld [vmem:[%s2] sm:$0x1]
        %v319 = vadd.f32 %v317, %v318
        %v320 = vld [vmem:[%s3] sm:$0x1]
        %v321 = vmul.f32 %v315, %v320
        %v322 = vld [vmem:[%s4] sm:$0x1]
        %v323 = vadd.f32 %v321, %v322
        %v324 = vld [vmem:[%s5] sm:$0xff]
        %v325 = vld [vmem:[%s5 + $0x8] sm:$0xff]
        %v326 = vld [vmem:[%s5 + $0x10] sm:$0xff]
        %v327 = vld [vmem:[%s5 + $0x18] sm:$0xff]
        %v328 = vld [vmem:[%s5 + $0x20] sm:$0xff]
        %v329 = vld [vmem:[%s5 + $0x28] sm:$0xff]
        %v330 = vld [vmem:[%s5 + $0x30] sm:$0xff]
        %v331 = vld [vmem:[%s5 + $0x38] sm:$0xff]
        %v332 = vld [vmem:[%s6] sm:$0xff]
        %v333 = vld [vmem:[%s6 + $0x8] sm:$0xff]
        %v334 = vld [vmem:[%s6 + $0x10] sm:$0xff]
        %v335 = vld [vmem:[%s6 + $0x18] sm:$0xff]
        %v336 = vld [vmem:[%s6 + $0x20] sm:$0xff]
        %v337 = vld [vmem:[%s6 + $0x28] sm:$0xff]
        %v338 = vld [vmem:[%s6 + $0x30] sm:$0xff]
        %v339 = vld [vmem:[%s6 + $0x38] sm:$0xff]
        %v341 = vsel %vm301, %v323, 0
        %343 = vmatpush.msra.mxu0 0.0
        %344 = vmatpush.msra.mxu0 0.0
        %345 = vmatpush.msra.mxu0 0.0
        %346 = vmatpush.msra.mxu0 0.0
        %347 = vmatpush.msra.mxu0 0.0
        %348 = vmatpush.msra.mxu0 0.0
        %349 = vmatpush.msra.mxu0 0.0
        %350 = vmatpush.msra.mxu0 0.0
        %351 = vmatpush.msra.mxu0 %v339
        %352 = vmatpush.msra.mxu0 %v338
        %353 = vmatpush.msra.mxu0 %v337
        %354 = vmatpush.msra.mxu0 %v336
        %355 = vmatpush.msra.mxu0 %v335
        %356 = vmatpush.msra.mxu0 %v334
        %357 = vmatpush.msra.mxu0 %v333
        %358 = vmatpush.msra.mxu0 %v332
        %359 = vmatmul.f32.gmra.mxu0 %v341
        %v360 = vpop.f32.mrf.mxu0
        %v361 = vadd.f32 0.0, %v360
        %362 = vdwg.mxu0
        %v364 = vsel %vm301, %v319, 0
        %366 = vmatpush.msra.mxu0 0.0
        %367 = vmatpush.msra.mxu0 0.0
        %368 = vmatpush.msra.mxu0 0.0
        %369 = vmatpush.msra.mxu0 0.0
        %370 = vmatpush.msra.mxu0 0.0
        %371 = vmatpush.msra.mxu0 0.0
        %372 = vmatpush.msra.mxu0 0.0
        %373 = vmatpush.msra.mxu0 0.0
        %374 = vmatpush.msra.mxu0 %v331
        %375 = vmatpush.msra.mxu0 %v330
        %376 = vmatpush.msra.mxu0 %v329
        %377 = vmatpush.msra.mxu0 %v328
        %378 = vmatpush.msra.mxu0 %v327
        %379 = vmatpush.msra.mxu0 %v326
        %380 = vmatpush.msra.mxu0 %v325
        %381 = vmatpush.msra.mxu0 %v324
        %382 = vmatmul.f32.gmra.mxu0 %v364
        %v383 = vpop.f32.mrf.mxu0
        %v384 = vadd.f32 %v361, %v383
        %385 = vdwg.mxu0
        %v386 = vld [vmem:[%s7] sm:$0x1]
        %v387 = vadd.f32 %v384, %v386
        %vm388 = vcmask 8192
        %389 = vst.msk [vmem:[%s295] sm:$0x1] %vm388, %v387
        %s390 = sand.u32 %s203, 1
        %s391 = scalar_lea.sflag [#allocation3], %s390
        %s392 = sand.u32 %s203, 1
        %s393 = scalar_lea.vmem [#allocation2], %s392
        // Predicated region
        $region53: #{_lambda_.7} parent=51 // pred_check
          %p394 = pneg %p213
        $region54: #{_lambda_.7} parent=51 // pred_check_branch
          %396 = sbr.rel (%p394) target = $region56
        $region55: #{_lambda_.7} parent=51 // pred_region
          %398 = vsyncadd %s391, 0
          %s399 = scalar_lea.hbm %s8, %s22
          %s401 = sshll.u32 %s393, 4
          %s402 = int_to_ptr.vmem [resolvable:$true] %s401
          %s403 = sshll.u32 %s399, 4
          %s404 = int_to_ptr.hbm [resolvable:$true] %s403
          %406 = dma.vmem_to_hbm [thread:$0]  %s402, 16, %s404, %s391
        $region56: #{_lambda_.7} parent=51 // pred_fallthru
          _
      $region52: #{_lambda_.7} parent=5 // pred_fallthru
        _
      %p407 = scmp.le.s32.totalorder 2, %s17
      // Predicated region
      $region57: #{_lambda_.7} parent=5 // pred_check
        %p408 = pneg %p407
      $region58: #{_lambda_.7} parent=5 // pred_check_branch
        %410 = sbr.rel (%p408) target = $region60
      $region59: #{_lambda_.7} parent=5 // pred_region
        %s411 = ssub.s32 %s17, 2
        // Predicated region
        $region61: #{_lambda_.7} parent=59 // pred_check
          %p412 = pneg %p219
        $region62: #{_lambda_.7} parent=59 // pred_check_branch
          %414 = sbr.rel (%p412) target = $region64
        $region63: #{_lambda_.7} parent=59 // pred_region
          %s415 = sand.u32 %s204, 1
          %s416 = scalar_lea.sflag [#allocation3], %s415
          %s417 = sand.u32 %s204, 1
          %s418 = scalar_lea.vmem [#allocation2], %s417
          %420 = dma.done %s416, 16
        $region64: #{_lambda_.7} parent=59 // pred_fallthru
          _
      $region60: #{_lambda_.7} parent=5 // pred_fallthru
        _
    $region6: #{_lambda_.7} parent=1 // loop_footer
      %s21 = sadd.s32 1, %s17
    $region7: #{_lambda_.7} parent=1 // loop_footer_branch
      %16 = sbr.rel target = $region3
    $region8: #{_lambda_.7} parent=1 // loop_exit
      _
    %421 = vsyncpa [#allocation3], 1
    %s422 = scalar_lea.sflag [#allocation3], 1
    %423 = vsyncpa %s422, 1

// kernel: _lambda_.6
$region0: #{_lambda_.6}
  #allocation0 [shape = 'u32[]', space=smem, size = 0x4, offset = 0x4, fixed_abs, tag = 'smem constant byte address 0x4 - core index']
  #allocation1 [shape = 'u32[72,128]{1,0:T(1,128)}', space=vmem, size = 0x9000, scoped, tag = 'internal scratch']
  #allocation2 [shape = 'f32[24,64]{1,0:T(8,128)}', space=vmem, size = 0x3000, scoped, tag = 'scratch operand']
  %s0 = inlined_call_operand.vmem [shape: f32[2,9,64], index: 0, kind: input, shape index: {}]
  %s1 = inlined_call_operand.vmem [shape: f32[2,9,64], index: 1, kind: input, shape index: {}]
  %s2 = inlined_call_operand.vmem [shape: f32[3,64,64], index: 2, kind: input, shape index: {}]
  %s3 = inlined_call_operand.vmem [shape: f32[1,64], index: 3, kind: input, shape index: {}]
  %s4 = inlined_call_operand.vmem [shape: f32[3,64,64], index: 4, kind: input, shape index: {}]
  %s5 = inlined_call_operand.vmem [shape: f32[1,64], index: 5, kind: input, shape index: {}]
  %s6 = inlined_call_operand.vmem [shape: f32[64,64], index: 6, kind: input, shape index: {}]
  %s7 = inlined_call_operand.vmem [shape: f32[1,64], index: 7, kind: input, shape index: {}]
  %s8 = inlined_call_operand.vmem [shape: f32[2,8,64], index: 8, kind: output, shape index: {}]
  %s9 = sld [smem:[#allocation0]]
  $region65: #{_lambda_.6} parent=0
    _
  %s11 = ssub.s32 1, %s9
  %s12 = scalar_select 0, %s11, %s9
  loop: start=0, step=1, limit=4
  $region2: #{_lambda_.6} parent=0 // loop_pre_header
    _
  $region3: #{_lambda_.6} parent=0 // loop_header
    %s14 = sphi 0, %s18
    %p15 = scmp.ge.s32.totalorder %s14, 4
    %s24 = sphi 0, %s26
    %s27 = sphi 0, %s24
    %s28 = sphi 0, %s27
    %s44 = sphi 0, %s28
    %s50 = sphi 0, %s52
    %s53 = sphi 0, %s50
    %s54 = sphi 0, %s53
    %s70 = sphi 0, %s54
    %s74 = sphi 0, %s74
    %s76 = sphi 0, %s74
    %s77 = sphi 0, %s76
    %s91 = sphi 0, %s77
    %s95 = sphi 0, %s95
    %s97 = sphi 0, %s95
    %s98 = sphi 0, %s97
    %s112 = sphi 0, %s98
    %s116 = sphi 0, %s116
    %s118 = sphi 0, %s116
    %s119 = sphi 0, %s118
    %s133 = sphi 0, %s119
    %s137 = sphi 0, %s137
    %s139 = sphi 0, %s137
    %s140 = sphi 0, %s139
    %s154 = sphi 0, %s140
    %s158 = sphi 0, %s158
    %s160 = sphi 0, %s158
    %s161 = sphi 0, %s160
    %s175 = sphi 0, %s161
    %s179 = sphi 0, %s179
    %s181 = sphi 0, %s179
    %s182 = sphi 0, %s181
    %s196 = sphi 0, %s182
    %s202 = sphi 0, %s204
    %s205 = sphi 0, %s202
    %s206 = sphi 0, %s205
    %s222 = sphi 0, %s206
  $region4: #{_lambda_.6} parent=0 // loop_header_branch
    %17 = sbr.rel (%p15) target = $region8
  $region5: #{_lambda_.6} parent=0 // loop_body
    %s19 = ssub.s32 %s14, 1
    %s20 = ssub.s32 %s14, 2
    %s21 = sadd.s32 %s14, 1
    %s22 = ssub.s32 %s14, %s21
    %p23 = scmp.eq.s32.totalorder %s22, 0
    %s25 = sadd.s32 %s24, 1
    %s26 = scalar_select %p23, %s24, %s25
    %p29 = pneg %p23
    %p30 = scmp.eq.s32.totalorder %s14, 1
    %p31 = por %p29, %p30
    %p32 = scmp.ne.s32.totalorder %s24, %s27
    %p33 = scmp.eq.s32.totalorder %s14, 0
    %p34 = por %p32, %p33
    %p35 = scmp.ne.s32.totalorder %s24, %s27
    %p36 = scmp.eq.s32.totalorder %s19, 1
    %p37 = por %p35, %p36
    %p38 = scmp.ne.s32.totalorder %s27, %s28
    %p39 = scmp.eq.s32.totalorder %s19, 0
    %p40 = por %p38, %p39
    %p41 = scmp.ne.s32.totalorder %s27, %s28
    %p42 = scmp.eq.s32.totalorder %s20, 1
    %p43 = por %p41, %p42
    %p45 = scmp.ne.s32.totalorder %s28, %s44
    %p46 = scmp.eq.s32.totalorder %s20, 0
    %p47 = por %p45, %p46
    %s48 = ssub.s32 %s14, %s21
    %p49 = scmp.eq.s32.totalorder %s48, 0
    %s51 = sadd.s32 %s50, 1
    %s52 = scalar_select %p49, %s50, %s51
    %p55 = pneg %p49
    %p56 = scmp.eq.s32.totalorder %s14, 1
    %p57 = por %p55, %p56
    %p58 = scmp.ne.s32.totalorder %s50, %s53
    %p59 = scmp.eq.s32.totalorder %s14, 0
    %p60 = por %p58, %p59
    %p61 = scmp.ne.s32.totalorder %s50, %s53
    %p62 = scmp.eq.s32.totalorder %s19, 1
    %p63 = por %p61, %p62
    %p64 = scmp.ne.s32.totalorder %s53, %s54
    %p65 = scmp.eq.s32.totalorder %s19, 0
    %p66 = por %p64, %p65
    %p67 = scmp.ne.s32.totalorder %s53, %s54
    %p68 = scmp.eq.s32.totalorder %s20, 1
    %p69 = por %p67, %p68
    %p71 = scmp.ne.s32.totalorder %s54, %s70
    %p72 = scmp.eq.s32.totalorder %s20, 0
    %p73 = por %p71, %p72
    %s75 = sadd.s32 %s74, 1
    %p78 = scmp.eq.s32.totalorder %s14, 1
    %p79 = scmp.ne.s32.totalorder %s74, %s76
    %p80 = scmp.eq.s32.totalorder %s14, 0
    %p81 = por %p79, %p80
    %p82 = scmp.ne.s32.totalorder %s74, %s76
    %p83 = scmp.eq.s32.totalorder %s19, 1
    %p84 = por %p82, %p83
    %p85 = scmp.ne.s32.totalorder %s76, %s77
    %p86 = scmp.eq.s32.totalorder %s19, 0
    %p87 = por %p85, %p86
    %p88 = scmp.ne.s32.totalorder %s76, %s77
    %p89 = scmp.eq.s32.totalorder %s20, 1
    %p90 = por %p88, %p89
    %p92 = scmp.ne.s32.totalorder %s77, %s91
    %p93 = scmp.eq.s32.totalorder %s20, 0
    %p94 = por %p92, %p93
    %s96 = sadd.s32 %s95, 1
    %p99 = scmp.eq.s32.totalorder %s14, 1
    %p100 = scmp.ne.s32.totalorder %s95, %s97
    %p101 = scmp.eq.s32.totalorder %s14, 0
    %p102 = por %p100, %p101
    %p103 = scmp.ne.s32.totalorder %s95, %s97
    %p104 = scmp.eq.s32.totalorder %s19, 1
    %p105 = por %p103, %p104
    %p106 = scmp.ne.s32.totalorder %s97, %s98
    %p107 = scmp.eq.s32.totalorder %s19, 0
    %p108 = por %p106, %p107
    %p109 = scmp.ne.s32.totalorder %s97, %s98
    %p110 = scmp.eq.s32.totalorder %s20, 1
    %p111 = por %p109, %p110
    %p113 = scmp.ne.s32.totalorder %s98, %s112
    %p114 = scmp.eq.s32.totalorder %s20, 0
    %p115 = por %p113, %p114
    %s117 = sadd.s32 %s116, 1
    %p120 = scmp.eq.s32.totalorder %s14, 1
    %p121 = scmp.ne.s32.totalorder %s116, %s118
    %p122 = scmp.eq.s32.totalorder %s14, 0
    %p123 = por %p121, %p122
    %p124 = scmp.ne.s32.totalorder %s116, %s118
    %p125 = scmp.eq.s32.totalorder %s19, 1
    %p126 = por %p124, %p125
    %p127 = scmp.ne.s32.totalorder %s118, %s119
    %p128 = scmp.eq.s32.totalorder %s19, 0
    %p129 = por %p127, %p128
    %p130 = scmp.ne.s32.totalorder %s118, %s119
    %p131 = scmp.eq.s32.totalorder %s20, 1
    %p132 = por %p130, %p131
    %p134 = scmp.ne.s32.totalorder %s119, %s133
    %p135 = scmp.eq.s32.totalorder %s20, 0
    %p136 = por %p134, %p135
    %s138 = sadd.s32 %s137, 1
    %p141 = scmp.eq.s32.totalorder %s14, 1
    %p142 = scmp.ne.s32.totalorder %s137, %s139
    %p143 = scmp.eq.s32.totalorder %s14, 0
    %p144 = por %p142, %p143
    %p145 = scmp.ne.s32.totalorder %s137, %s139
    %p146 = scmp.eq.s32.totalorder %s19, 1
    %p147 = por %p145, %p146
    %p148 = scmp.ne.s32.totalorder %s139, %s140
    %p149 = scmp.eq.s32.totalorder %s19, 0
    %p150 = por %p148, %p149
    %p151 = scmp.ne.s32.totalorder %s139, %s140
    %p152 = scmp.eq.s32.totalorder %s20, 1
    %p153 = por %p151, %p152
    %p155 = scmp.ne.s32.totalorder %s140, %s154
    %p156 = scmp.eq.s32.totalorder %s20, 0
    %p157 = por %p155, %p156
    %s159 = sadd.s32 %s158, 1
    %p162 = scmp.eq.s32.totalorder %s14, 1
    %p163 = scmp.ne.s32.totalorder %s158, %s160
    %p164 = scmp.eq.s32.totalorder %s14, 0
    %p165 = por %p163, %p164
    %p166 = scmp.ne.s32.totalorder %s158, %s160
    %p167 = scmp.eq.s32.totalorder %s19, 1
    %p168 = por %p166, %p167
    %p169 = scmp.ne.s32.totalorder %s160, %s161
    %p170 = scmp.eq.s32.totalorder %s19, 0
    %p171 = por %p169, %p170
    %p172 = scmp.ne.s32.totalorder %s160, %s161
    %p173 = scmp.eq.s32.totalorder %s20, 1
    %p174 = por %p172, %p173
    %p176 = scmp.ne.s32.totalorder %s161, %s175
    %p177 = scmp.eq.s32.totalorder %s20, 0
    %p178 = por %p176, %p177
    %s180 = sadd.s32 %s179, 1
    %p183 = scmp.eq.s32.totalorder %s14, 1
    %p184 = scmp.ne.s32.totalorder %s179, %s181
    %p185 = scmp.eq.s32.totalorder %s14, 0
    %p186 = por %p184, %p185
    %p187 = scmp.ne.s32.totalorder %s179, %s181
    %p188 = scmp.eq.s32.totalorder %s19, 1
    %p189 = por %p187, %p188
    %p190 = scmp.ne.s32.totalorder %s181, %s182
    %p191 = scmp.eq.s32.totalorder %s19, 0
    %p192 = por %p190, %p191
    %p193 = scmp.ne.s32.totalorder %s181, %s182
    %p194 = scmp.eq.s32.totalorder %s20, 1
    %p195 = por %p193, %p194
    %p197 = scmp.ne.s32.totalorder %s182, %s196
    %p198 = scmp.eq.s32.totalorder %s20, 0
    %p199 = por %p197, %p198
    %s200 = ssub.s32 %s14, %s21
    %p201 = scmp.eq.s32.totalorder %s200, 0
    %s203 = sadd.s32 %s202, 1
    %s204 = scalar_select %p201, %s202, %s203
    %p207 = pneg %p201
    %p208 = scmp.eq.s32.totalorder %s14, 1
    %p209 = por %p207, %p208
    %p210 = scmp.ne.s32.totalorder %s202, %s205
    %p211 = scmp.eq.s32.totalorder %s14, 0
    %p212 = por %p210, %p211
    %p213 = scmp.ne.s32.totalorder %s202, %s205
    %p214 = scmp.eq.s32.totalorder %s19, 1
    %p215 = por %p213, %p214
    %p216 = scmp.ne.s32.totalorder %s205, %s206
    %p217 = scmp.eq.s32.totalorder %s19, 0
    %p218 = por %p216, %p217
    %p219 = scmp.ne.s32.totalorder %s205, %s206
    %p220 = scmp.eq.s32.totalorder %s20, 1
    %p221 = por %p219, %p220
    %p223 = scmp.ne.s32.totalorder %s206, %s222
    %p224 = scmp.eq.s32.totalorder %s20, 0
    %p225 = por %p223, %p224
    %p226 = scmp.le.s32.totalorder 1, %s14
    %p227 = scmp.lt.s32.totalorder %s14, 3
    %p228 = pnand %p226, %p227
    %p229 = pneg %p228
    // Predicated region
    $region9: #{_lambda_.6} parent=5 // pred_check
      _
    $region10: #{_lambda_.6} parent=5 // pred_check_branch
      %231 = sbr.rel (%p228) target = $region12
    $region11: #{_lambda_.6} parent=5 // pred_region
      %s232 = ssub.s32 %s14, 1
      // Predicated region
      $region13: #{_lambda_.6} parent=11 // pred_check
        %p233 = pneg %p87
      $region14: #{_lambda_.6} parent=11 // pred_check_branch
        %235 = sbr.rel (%p233) target = $region16
      $region15: #{_lambda_.6} parent=11 // pred_region
        _
      $region16: #{_lambda_.6} parent=11 // pred_fallthru
        _
      // Predicated region
      $region17: #{_lambda_.6} parent=11 // pred_check
        %p236 = pneg %p108
      $region18: #{_lambda_.6} parent=11 // pred_check_branch
        %238 = sbr.rel (%p236) target = $region20
      $region19: #{_lambda_.6} parent=11 // pred_region
        _
      $region20: #{_lambda_.6} parent=11 // pred_fallthru
        _
      // Predicated region
      $region21: #{_lambda_.6} parent=11 // pred_check
        %p239 = pneg %p129
      $region22: #{_lambda_.6} parent=11 // pred_check_branch
        %241 = sbr.rel (%p239) target = $region24
      $region23: #{_lambda_.6} parent=11 // pred_region
        _
      $region24: #{_lambda_.6} parent=11 // pred_fallthru
        _
      // Predicated region
      $region25: #{_lambda_.6} parent=11 // pred_check
        %p242 = pneg %p150
      $region26: #{_lambda_.6} parent=11 // pred_check_branch
        %244 = sbr.rel (%p242) target = $region28
      $region27: #{_lambda_.6} parent=11 // pred_region
        _
      $region28: #{_lambda_.6} parent=11 // pred_fallthru
        _
      // Predicated region
      $region29: #{_lambda_.6} parent=11 // pred_check
        %p245 = pneg %p171
      $region30: #{_lambda_.6} parent=11 // pred_check_branch
        %247 = sbr.rel (%p245) target = $region32
      $region31: #{_lambda_.6} parent=11 // pred_region
        _
      $region32: #{_lambda_.6} parent=11 // pred_fallthru
        _
      // Predicated region
      $region33: #{_lambda_.6} parent=11 // pred_check
        %p248 = pneg %p192
      $region34: #{_lambda_.6} parent=11 // pred_check_branch
        %250 = sbr.rel (%p248) target = $region36
      $region35: #{_lambda_.6} parent=11 // pred_region
        _
      $region36: #{_lambda_.6} parent=11 // pred_fallthru
        _
    $region12: #{_lambda_.6} parent=5 // pred_fallthru
      _
    %p251 = scmp.lt.s32.totalorder %s14, 2
    // Predicated region
    $region37: #{_lambda_.6} parent=5 // pred_check
      %p252 = pneg %p251
    $region38: #{_lambda_.6} parent=5 // pred_check_branch
      %254 = sbr.rel (%p252) target = $region40
    $region39: #{_lambda_.6} parent=5 // pred_region
      // Predicated region
      $region41: #{_lambda_.6} parent=39 // pred_check
        %p255 = pneg %p34
      $region42: #{_lambda_.6} parent=39 // pred_check_branch
        %257 = sbr.rel (%p255) target = $region44
      $region43: #{_lambda_.6} parent=39 // pred_region
        %p258 = scmp.lt.s32.totalorder %s14, 1
        %s259 = scalar_select %p258, %s14, 1
        %s260 = smul.addr %s259, 2
        %s261 = smul.addr %s260, 8
        %s262 = scalar_lea.vmem %s0, %s261
      $region44: #{_lambda_.6} parent=39 // pred_fallthru
        _
      // Predicated region
      $region45: #{_lambda_.6} parent=39 // pred_check
        %p263 = pneg %p60
      $region46: #{_lambda_.6} parent=39 // pred_check_branch
        %265 = sbr.rel (%p263) target = $region48
      $region47: #{_lambda_.6} parent=39 // pred_region
        %p266 = scmp.lt.s32.totalorder %s14, 1
        %s267 = scalar_select %p266, %s14, 1
        %s268 = smul.addr %s267, 2
        %s269 = smul.addr %s268, 8
        %s270 = scalar_lea.vmem %s1, %s269
      $region48: #{_lambda_.6} parent=39 // pred_fallthru
        _
    $region40: #{_lambda_.6} parent=5 // pred_fallthru
      _
    %p271 = scmp.le.s32.totalorder 1, %s14
    %p272 = scmp.lt.s32.totalorder %s14, 3
    %p273 = pnand %p271, %p272
    %p274 = pneg %p273
    // Predicated region
    $region49: #{_lambda_.6} parent=5 // pred_check
      _
    $region50: #{_lambda_.6} parent=5 // pred_check_branch
      %276 = sbr.rel (%p273) target = $region52
    $region51: #{_lambda_.6} parent=5 // pred_region
      %s277 = ssub.s32 %s14, 1
      %p278 = scmp.lt.s32.totalorder %s19, 1
      %s279 = scalar_select %p278, %s19, 1
      %s280 = smul.addr %s279, 2
      %s281 = smul.addr %s280, 8
      %s282 = scalar_lea.vmem %s0, %s281
      %p283 = pneg %p40
      %p284 = pneg %p37
      %p285 = scmp.lt.s32.totalorder %s19, 1
      %s286 = scalar_select %p285, %s19, 1
      %s287 = smul.addr %s286, 2
      %s288 = smul.addr %s287, 8
      %s289 = scalar_lea.vmem %s1, %s288
      %p290 = pneg %p66
      %p291 = pneg %p63
      %p292 = pneg %p87
      %p293 = pneg %p84
      %p294 = pneg %p108
      %p295 = pneg %p105
      %p296 = pneg %p129
      %p297 = pneg %p126
      %p298 = pneg %p150
      %p299 = pneg %p147
      %p300 = pneg %p171
      %p301 = pneg %p168
      %p302 = pneg %p192
      %p303 = pneg %p189
      %p304 = pneg %p218
      %p305 = pneg %p215
      %p306 = scmp.lt.s32.totalorder %s19, 1
      %s307 = scalar_select %p306, %s19, 1
      %s308 = smul.addr %s307, 8
      %s309 = scalar_lea.vmem %s8, %s308
      %p310 = scmp.lt.s32.totalorder %s19, 1
      %s311 = scalar_select %p310, %s19, 1
      %s312 = smul.addr %s311, 2
      %s313 = smul.addr %s312, 8
      %s314 = scalar_lea.vmem %s0, %s313
      %p315 = scmp.lt.s32.totalorder %s19, 1
      %s316 = scalar_select %p315, %s19, 1
      %s317 = smul.addr %s316, 2
      %s318 = smul.addr %s317, 8
      %s319 = scalar_lea.vmem %s1, %s318
      %p320 = scmp.lt.s32.totalorder %s19, 1
      %s321 = scalar_select %p320, %s19, 1
      %s322 = smul.addr %s321, 8
      %s323 = scalar_lea.vmem %s8, %s322
      %v324 = vld [vmem:[%s319] sm:$0xff]
      %v325 = vld [vmem:[%s314] sm:$0xff]
      %v326 = vld [vmem:[%s2] sm:$0xff]
      %v327 = vld [vmem:[%s2 + $0x8] sm:$0xff]
      %v328 = vld [vmem:[%s2 + $0x10] sm:$0xff]
      %v329 = vld [vmem:[%s2 + $0x18] sm:$0xff]
      %v330 = vld [vmem:[%s2 + $0x20] sm:$0xff]
      %v331 = vld [vmem:[%s2 + $0x28] sm:$0xff]
      %v332 = vld [vmem:[%s2 + $0x30] sm:$0xff]
      %v333 = vld [vmem:[%s2 + $0x38] sm:$0xff]
      %s334 = scalar_lea.vmem %s2, 64
      %v335 = vld [vmem:[%s334] sm:$0xff]
      %v336 = vld [vmem:[%s334 + $0x8] sm:$0xff]
      %v337 = vld [vmem:[%s334 + $0x10] sm:$0xff]
      %v338 = vld [vmem:[%s334 + $0x18] sm:$0xff]
      %v339 = vld [vmem:[%s334 + $0x20] sm:$0xff]
      %v340 = vld [vmem:[%s334 + $0x28] sm:$0xff]
      %v341 = vld [vmem:[%s334 + $0x30] sm:$0xff]
      %v342 = vld [vmem:[%s334 + $0x38] sm:$0xff]
      %vm343 = vcmask 523264
      %v345 = vsel %vm343, %v324, 0
      %347 = vmatpush.msra.mxu0 0.0
      %348 = vmatpush.msra.mxu0 0.0
      %349 = vmatpush.msra.mxu0 0.0
      %350 = vmatpush.msra.mxu0 0.0
      %351 = vmatpush.msra.mxu0 0.0
      %352 = vmatpush.msra.mxu0 0.0
      %353 = vmatpush.msra.mxu0 0.0
      %354 = vmatpush.msra.mxu0 0.0
      %355 = vmatpush.msra.mxu0 %v342
      %356 = vmatpush.msra.mxu0 %v341
      %357 = vmatpush.msra.mxu0 %v340
      %358 = vmatpush.msra.mxu0 %v339
      %359 = vmatpush.msra.mxu0 %v338
      %360 = vmatpush.msra.mxu0 %v337
      %361 = vmatpush.msra.mxu0 %v336
      %362 = vmatpush.msra.mxu0 %v335
      %363 = vmatmul.f32.gmra.mxu0 %v345
      %v364 = vpop.f32.mrf.mxu0
      %v365 = vadd.f32 0.0, %v364
      %366 = vdwg.mxu0
      %v368 = vsel %vm343, %v325, 0
      %370 = vmatpush.msra.mxu0 0.0
      %371 = vmatpush.msra.mxu0 0.0
      %372 = vmatpush.msra.mxu0 0.0
      %373 = vmatpush.msra.mxu0 0.0
      %374 = vmatpush.msra.mxu0 0.0
      %375 = vmatpush.msra.mxu0 0.0
      %376 = vmatpush.msra.mxu0 0.0
      %377 = vmatpush.msra.mxu0 0.0
      %378 = vmatpush.msra.mxu0 %v333
      %379 = vmatpush.msra.mxu0 %v332
      %380 = vmatpush.msra.mxu0 %v331
      %381 = vmatpush.msra.mxu0 %v330
      %382 = vmatpush.msra.mxu0 %v329
      %383 = vmatpush.msra.mxu0 %v328
      %384 = vmatpush.msra.mxu0 %v327
      %385 = vmatpush.msra.mxu0 %v326
      %386 = vmatmul.f32.gmra.mxu0 %v368
      %v387 = vpop.f32.mrf.mxu0
      %v388 = vadd.f32 %v365, %v387
      %389 = vdwg.mxu0
      %v390 = vld [vmem:[%s314 + $0x1] sm:$0xff]
      %s391 = scalar_lea.vmem %s2, 128
      %v392 = vld [vmem:[%s391] sm:$0xff]
      %v393 = vld [vmem:[%s391 + $0x8] sm:$0xff]
      %v394 = vld [vmem:[%s391 + $0x10] sm:$0xff]
      %v395 = vld [vmem:[%s391 + $0x18] sm:$0xff]
      %v396 = vld [vmem:[%s391 + $0x20] sm:$0xff]
      %v397 = vld [vmem:[%s391 + $0x28] sm:$0xff]
      %v398 = vld [vmem:[%s391 + $0x30] sm:$0xff]
      %v399 = vld [vmem:[%s391 + $0x38] sm:$0xff]
      %v401 = vsel %vm343, %v390, 0
      %403 = vmatpush.msra.mxu0 0.0
      %404 = vmatpush.msra.mxu0 0.0
      %405 = vmatpush.msra.mxu0 0.0
      %406 = vmatpush.msra.mxu0 0.0
      %407 = vmatpush.msra.mxu0 0.0
      %408 = vmatpush.msra.mxu0 0.0
      %409 = vmatpush.msra.mxu0 0.0
      %410 = vmatpush.msra.mxu0 0.0
      %411 = vmatpush.msra.mxu0 %v399
      %412 = vmatpush.msra.mxu0 %v398
      %413 = vmatpush.msra.mxu0 %v397
      %414 = vmatpush.msra.mxu0 %v396
      %415 = vmatpush.msra.mxu0 %v395
      %416 = vmatpush.msra.mxu0 %v394
      %417 = vmatpush.msra.mxu0 %v393
      %418 = vmatpush.msra.mxu0 %v392
      %419 = vmatmul.f32.gmra.mxu0 %v401
      %v420 = vpop.f32.mrf.mxu0
      %v421 = vadd.f32 0.0, %v420
      %422 = vdwg.mxu0
      %v423 = vadd.f32 %v388, %v421
      %v424 = vld [vmem:[%s3] sm:$0x1]
      %v426 = vperm.slane %v424, 0
      %v428 = vadd.f32 %v423, %v426
      %v429 = vmax.f32 %v428, 0.0
      %430 = vst.msk [vmem:[#allocation2] sm:$0xff] %vm343, 0.0
      %431 = vst.msk [vmem:[#allocation2 + $0x8] sm:$0xff] %vm343, 0.0
      %432 = vst.msk [vmem:[#allocation2 + $0x10] sm:$0xff] %vm343, 0.0
      %433 = vst.msk [vmem:[#allocation2 + $0x8] sm:$0xff] %vm343, %v429
      %v434 = vld [vmem:[#allocation2 + $0x7] sm:$0xff]
      %v435 = vld [vmem:[%s4] sm:$0xff]
      %v436 = vld [vmem:[%s4 + $0x8] sm:$0xff]
      %v437 = vld [vmem:[%s4 + $0x10] sm:$0xff]
      %v438 = vld [vmem:[%s4 + $0x18] sm:$0xff]
      %v439 = vld [vmem:[%s4 + $0x20] sm:$0xff]
      %v440 = vld [vmem:[%s4 + $0x28] sm:$0xff]
      %v441 = vld [vmem:[%s4 + $0x30] sm:$0xff]
      %v442 = vld [vmem:[%s4 + $0x38] sm:$0xff]
      %v443 = vld [vmem:[#allocation2 + $0x8] sm:$0xff]
      %s444 = scalar_lea.vmem %s4, 64
      %v445 = vld [vmem:[%s444] sm:$0xff]
      %v446 = vld [vmem:[%s444 + $0x8] sm:$0xff]
      %v447 = vld [vmem:[%s444 + $0x10] sm:$0xff]
      %v448 = vld [vmem:[%s444 + $0x18] sm:$0xff]
      %v449 = vld [vmem:[%s444 + $0x20] sm:$0xff]
      %v450 = vld [vmem:[%s444 + $0x28] sm:$0xff]
      %v451 = vld [vmem:[%s444 + $0x30] sm:$0xff]
      %v452 = vld [vmem:[%s444 + $0x38] sm:$0xff]
      %v454 = vsel %vm343, %v443, 0
      %456 = vmatpush.msra.mxu0 0.0
      %457 = vmatpush.msra.mxu0 0.0
      %458 = vmatpush.msra.mxu0 0.0
      %459 = vmatpush.msra.mxu0 0.0
      %460 = vmatpush.msra.mxu0 0.0
      %461 = vmatpush.msra.mxu0 0.0
      %462 = vmatpush.msra.mxu0 0.0
      %463 = vmatpush.msra.mxu0 0.0
      %464 = vmatpush.msra.mxu0 %v452
      %465 = vmatpush.msra.mxu0 %v451
      %466 = vmatpush.msra.mxu0 %v450
      %467 = vmatpush.msra.mxu0 %v449
      %468 = vmatpush.msra.mxu0 %v448
      %469 = vmatpush.msra.mxu0 %v447
      %470 = vmatpush.msra.mxu0 %v446
      %471 = vmatpush.msra.mxu0 %v445
      %472 = vmatmul.f32.gmra.mxu0 %v454
      %v473 = vpop.f32.mrf.mxu0
      %v474 = vadd.f32 0.0, %v473
      %475 = vdwg.mxu0
      %v477 = vsel %vm343, %v434, 0
      %479 = vmatpush.msra.mxu0 0.0
      %480 = vmatpush.msra.mxu0 0.0
      %481 = vmatpush.msra.mxu0 0.0
      %482 = vmatpush.msra.mxu0 0.0
      %483 = vmatpush.msra.mxu0 0.0
      %484 = vmatpush.msra.mxu0 0.0
      %485 = vmatpush.msra.mxu0 0.0
      %486 = vmatpush.msra.mxu0 0.0
      %487 = vmatpush.msra.mxu0 %v442
      %488 = vmatpush.msra.mxu0 %v441
      %489 = vmatpush.msra.mxu0 %v440
      %490 = vmatpush.msra.mxu0 %v439
      %491 = vmatpush.msra.mxu0 %v438
      %492 = vmatpush.msra.mxu0 %v437
      %493 = vmatpush.msra.mxu0 %v436
      %494 = vmatpush.msra.mxu0 %v435
      %495 = vmatmul.f32.gmra.mxu0 %v477
      %v496 = vpop.f32.mrf.mxu0
      %v497 = vadd.f32 %v474, %v496
      %498 = vdwg.mxu0
      %v499 = vld [vmem:[#allocation2 + $0x9] sm:$0xff]
      %s500 = scalar_lea.vmem %s4, 128
      %v501 = vld [vmem:[%s500] sm:$0xff]
      %v502 = vld [vmem:[%s500 + $0x8] sm:$0xff]
      %v503 = vld [vmem:[%s500 + $0x10] sm:$0xff]
      %v504 = vld [vmem:[%s500 + $0x18] sm:$0xff]
      %v505 = vld [vmem:[%s500 + $0x20] sm:$0xff]
      %v506 = vld [vmem:[%s500 + $0x28] sm:$0xff]
      %v507 = vld [vmem:[%s500 + $0x30] sm:$0xff]
      %v508 = vld [vmem:[%s500 + $0x38] sm:$0xff]
      %v510 = vsel %vm343, %v499, 0
      %512 = vmatpush.msra.mxu0 0.0
      %513 = vmatpush.msra.mxu0 0.0
      %514 = vmatpush.msra.mxu0 0.0
      %515 = vmatpush.msra.mxu0 0.0
      %516 = vmatpush.msra.mxu0 0.0
      %517 = vmatpush.msra.mxu0 0.0
      %518 = vmatpush.msra.mxu0 0.0
      %519 = vmatpush.msra.mxu0 0.0
      %520 = vmatpush.msra.mxu0 %v508
      %521 = vmatpush.msra.mxu0 %v507
      %522 = vmatpush.msra.mxu0 %v506
      %523 = vmatpush.msra.mxu0 %v505
      %524 = vmatpush.msra.mxu0 %v504
      %525 = vmatpush.msra.mxu0 %v503
      %526 = vmatpush.msra.mxu0 %v502
      %527 = vmatpush.msra.mxu0 %v501
      %528 = vmatmul.f32.gmra.mxu0 %v510
      %v529 = vpop.f32.mrf.mxu0
      %v530 = vadd.f32 0.0, %v529
      %531 = vdwg.mxu0
      %v532 = vadd.f32 %v497, %v530
      %v533 = vld [vmem:[%s5] sm:$0x1]
      %v535 = vperm.slane %v533, 0
      %v537 = vadd.f32 %v532, %v535
      %v538 = vld [vmem:[%s6] sm:$0xff]
      %v539 = vld [vmem:[%s6 + $0x8] sm:$0xff]
      %v540 = vld [vmem:[%s6 + $0x10] sm:$0xff]
      %v541 = vld [vmem:[%s6 + $0x18] sm:$0xff]
      %v542 = vld [vmem:[%s6 + $0x20] sm:$0xff]
      %v543 = vld [vmem:[%s6 + $0x28] sm:$0xff]
      %v544 = vld [vmem:[%s6 + $0x30] sm:$0xff]
      %v545 = vld [vmem:[%s6 + $0x38] sm:$0xff]
      %v546 = vld [vmem:[%s7] sm:$0x1]
      %v548 = vperm.slane %v546, 0
      %550 = vmatpush.msra.mxu0 0.0
      %551 = vmatpush.msra.mxu0 0.0
      %552 = vmatpush.msra.mxu0 0.0
      %553 = vmatpush.msra.mxu0 0.0
      %554 = vmatpush.msra.mxu0 0.0
      %555 = vmatpush.msra.mxu0 0.0
      %556 = vmatpush.msra.mxu0 0.0
      %557 = vmatpush.msra.mxu0 0.0
      %558 = vmatpush.msra.mxu0 %v545
      %559 = vmatpush.msra.mxu0 %v544
      %560 = vmatpush.msra.mxu0 %v543
      %561 = vmatpush.msra.mxu0 %v542
      %562 = vmatpush.msra.mxu0 %v541
      %563 = vmatpush.msra.mxu0 %v540
      %564 = vmatpush.msra.mxu0 %v539
      %565 = vmatpush.msra.mxu0 %v538
      %566 = vmatmul.f32.gmra.mxu0 %v345
      %v567 = vpop.f32.mrf.mxu0
      %v568 = vadd.f32 %v548, %v567
      %569 = vdwg.mxu0
      %v570 = vadd.f32 %v537, %v568
      %v571 = vmax.f32 %v570, 0.0
      %572 = vst.msk [vmem:[%s323] sm:$0xff] %vm343, %v571
      %p573 = scmp.lt.s32.totalorder %s19, 1
      %s574 = scalar_select %p573, %s19, 1
      %s575 = smul.addr %s574, 8
      %s576 = scalar_lea.vmem %s8, %s575
      // Predicated region
      $region53: #{_lambda_.6} parent=51 // pred_check
        %p577 = pneg %p215
      $region54: #{_lambda_.6} parent=51 // pred_check_branch
        %579 = sbr.rel (%p577) target = $region56
      $region55: #{_lambda_.6} parent=51 // pred_region
        _
      $region56: #{_lambda_.6} parent=51 // pred_fallthru
        _
    $region52: #{_lambda_.6} parent=5 // pred_fallthru
      _
    %p580 = scmp.le.s32.totalorder 2, %s14
    // Predicated region
    $region57: #{_lambda_.6} parent=5 // pred_check
      %p581 = pneg %p580
    $region58: #{_lambda_.6} parent=5 // pred_check_branch
      %583 = sbr.rel (%p581) target = $region60
    $region59: #{_lambda_.6} parent=5 // pred_region
      %s584 = ssub.s32 %s14, 2
      // Predicated region
      $region61: #{_lambda_.6} parent=59 // pred_check
        %p585 = pneg %p221
      $region62: #{_lambda_.6} parent=59 // pred_check_branch
        %587 = sbr.rel (%p585) target = $region64
      $region63: #{_lambda_.6} parent=59 // pred_region
        %p588 = scmp.lt.s32.totalorder %s20, 1
        %s589 = scalar_select %p588, %s20, 1
        %s590 = smul.addr %s589, 8
        %s591 = scalar_lea.vmem %s8, %s590
      $region64: #{_lambda_.6} parent=59 // pred_fallthru
        _
    $region60: #{_lambda_.6} parent=5 // pred_fallthru
      _
  $region6: #{_lambda_.6} parent=0 // loop_footer
    %s18 = sadd.s32 1, %s14
  $region7: #{_lambda_.6} parent=0 // loop_footer_branch
    %13 = sbr.rel target = $region3
  $region8: #{_lambda_.6} parent=0 // loop_exit
    _

</llo_original>
